<compile_context>
chip_gen: v7x
topology: tpu7x:2x2x1
jax: 0.10.0
libtpu: 0.0.40
codegen_flags: <defaults>
</compile_context>

<pallas_src>
import functools

import jax
import jax.numpy as jnp
from jax import lax
from jax.experimental import pallas as pl
from jax.experimental.pallas import tpu as pltpu


def _round_up(n, m):
    return ((n + m - 1) // m) * m


def _sys2net2_kernel(num_hidden_stack, unroll_hidden,
                     x_ref, wf_ref, bf_ref, wh_ref, bh_ref, wl_ref, bl_ref,
                     o_ref):
    """x_ref: (tb, Din); w*: bf16; b*: f32; o_ref: (tb, Dout)."""
    # Layer 0: input -> hidden. bf16 MXU operands, f32 accumulation.
    h = jnp.maximum(
        jnp.dot(x_ref[...].astype(jnp.bfloat16), wf_ref[...],
                preferred_element_type=jnp.float32) + bf_ref[...], 0.0)
    # TODO(synk): training-mode dropout (stochastic masking) not implemented;
    # inference/eval semantics (identity) are used.

    def hidden_layer(l, h):
        z = jnp.dot(h.astype(jnp.bfloat16), wh_ref[l],
                    preferred_element_type=jnp.float32) + bh_ref[l]
        return jnp.maximum(z, 0.0)

    if num_hidden_stack > 0:
        if unroll_hidden:
            for l in range(num_hidden_stack):   # small static unroll
                h = hidden_layer(l, h)
        else:
            # Deep nets: bound live ranges / code size with a real loop.
            h = lax.fori_loop(0, num_hidden_stack, hidden_layer, h)

    # Last layer + residual + sigmoid. Re-read x_ref here (the input tile is
    # already resident in VMEM) instead of holding f32 x live across layers.
    z = jnp.dot(h.astype(jnp.bfloat16), wl_ref[...],
                preferred_element_type=jnp.float32) + bl_ref[...]
    y = jnp.maximum(z, 0.0) + x_ref[...].astype(jnp.float32)
    # sigmoid(y) = 1 / (1 + exp(-y)); exp runs on the EUP. Clamp keeps exp
    # finite in f32 (sigmoid(y < -80) -> ~2e-35 instead of exact 0: negligible).
    e = jnp.exp(jnp.minimum(-y, 80.0))
    o_ref[...] = pl.reciprocal(1.0 + e, approx=False).astype(o_ref.dtype)


def prepare_params(weights, biases):
    """One-time per-layer padding + stacking (hoisted off the forward path).

    weights[i]: (in_i, out_i) — transposed from PyTorch's [out, in] so the hot
    path is `x @ W + b` on the MXU. biases[i]: (out_i,).
    """
    num_layers = len(weights)
    assert num_layers >= 2, "need >= 1 hidden layer plus the output layer"
    f_in = weights[0].shape[0]
    hid = weights[0].shape[1]
    f_out = weights[-1].shape[1]
    assert weights[-1].shape[0] == hid
    assert f_out == f_in, "residual add requires output_size == input_size"

    din = _round_up(f_in, 128)
    dh = _round_up(hid, 128)
    dout = _round_up(f_out, 128)

    def pad_w(w, rows, cols):
        return jnp.pad(w.astype(jnp.bfloat16),
                       ((0, rows - w.shape[0]), (0, cols - w.shape[1])))

    def pad_b(b, cols):
        return jnp.pad(b.astype(jnp.float32), (0, cols - b.shape[0])).reshape(1, cols)

    w_first = pad_w(weights[0], din, dh)
    b_first = pad_b(biases[0], dh)
    w_last = pad_w(weights[-1], dh, dout)
    b_last = pad_b(biases[-1], dout)

    n_hid = num_layers - 2               # hidden -> hidden layers
    n_hid_alloc = max(n_hid, 1)          # keep pallas_call args non-empty
    w_hid = jnp.zeros((n_hid_alloc, dh, dh), jnp.bfloat16)
    b_hid = jnp.zeros((n_hid_alloc, 1, dh), jnp.float32)
    for l in range(n_hid):
        w_hid = w_hid.at[l].set(pad_w(weights[1 + l], dh, dh))
        b_hid = b_hid.at[l].set(pad_b(biases[1 + l], dh))

    arrays = dict(w_first=w_first, b_first=b_first, w_hid=w_hid, b_hid=b_hid,
                  w_last=w_last, b_last=b_last)
    meta = dict(f_in=f_in, f_out=f_out, din=din, dh=dh, dout=dout, n_hid=n_hid)
    return arrays, meta


def sys2net2_forward(x, params, *, batch_tile=None):
    arrays, meta = params
    B = x.shape[0]
    f_in, f_out = meta["f_in"], meta["f_out"]
    din, dh, dout = meta["din"], meta["dh"], meta["dout"]
    n_hid = meta["n_hid"]
    n_hid_alloc = arrays["w_hid"].shape[0]
    assert x.shape[1] == f_in
    assert din == dout, "residual add inside the kernel needs matching widths"

    in_dtype = x.dtype
    out_dtype = x.dtype                       # write output in caller's dtype
    in_bytes = jnp.dtype(in_dtype).itemsize
    out_bytes = jnp.dtype(out_dtype).itemsize

    # Resident (single-buffered) parameter bytes: bf16 weights + f32 biases.
    param_bytes = ((din * dh + n_hid_alloc * dh * dh + dh * dout) * 2
                   + (dh + n_hid_alloc * dh + dout) * 4)

    # Generation-aware VMEM cap: ~48 MiB on v7x (64 MiB/TC), ~96 MiB on v5e/v6e.
    try:
        vmem_capacity = pltpu.get_tpu_info().vmem_capacity_bytes
    except Exception:
        vmem_capacity = 64 << 20              # conservative (v7x per-TC)
    vmem_cap = int(vmem_capacity * 3 // 4)
    # TODO(synk): if param_bytes ever exceeds ~20-24 MiB (deep/wide nets on
    # v7x) switch to streaming the weight stack per layer instead of keeping
    # it fully resident; at these sizes the resident path is strictly better.

    def vmem_est(tb):
        return (2 * tb * din * in_bytes       # double-buffered input tiles
                + 2 * tb * dout * out_bytes   # double-buffered output tiles
                + param_bytes)                # resident params (Buffered(1))

    # Batch tiling: target >= 8 grid steps (>= 4 per v7x core on the
    # "parallel" axis, pipeline steady state), then shrink to fit VMEM.
    if batch_tile is None:
        batch_tile = max(8, min(1024, pl.next_power_of_2(pl.cdiv(B, 8))))
    while batch_tile > 8 and vmem_est(batch_tile) > vmem_cap:
        batch_tile //= 2
    B_pad = _round_up(B, batch_tile)

    x_pad = x
    if (B_pad, din) != (B, f_in):
        x_pad = jnp.pad(x, ((0, B_pad - B), (0, din - f_in)))

    cp_kwargs = dict(dimension_semantics=("parallel",))
    est = vmem_est(batch_tile)
    if est > 24 * 1024 * 1024:
        cp_kwargs["vmem_limit_bytes"] = int(min(est + (8 << 20), vmem_cap))

    flops = 2 * B_pad * (din * dh + n_hid * dh * dh + dh * dout)
    cost = pl.CostEstimate(
        flops=flops,
        transcendentals=2 * B_pad * dout,     # exp + reciprocal per element
        bytes_accessed=(B_pad * din * in_bytes + B_pad * dout * out_bytes
                        + param_bytes))

    kernel = functools.partial(_sys2net2_kernel, n_hid, n_hid <= 4)
    grid = (B_pad // batch_tile,)

    def build(single_buffer_params):
        pkw = {"pipeline_mode": pl.Buffered(1)} if single_buffer_params else {}
        in_specs = [
            pl.BlockSpec((batch_tile, din), lambda i: (i, 0)),
            pl.BlockSpec((din, dh), lambda i: (0, 0), **pkw),
            pl.BlockSpec((1, dh), lambda i: (0, 0), **pkw),
            pl.BlockSpec((n_hid_alloc, dh, dh), lambda i: (0, 0, 0), **pkw),
            pl.BlockSpec((n_hid_alloc, 1, dh), lambda i: (0, 0, 0), **pkw),
            pl.BlockSpec((dh, dout), lambda i: (0, 0), **pkw),
            pl.BlockSpec((1, dout), lambda i: (0, 0), **pkw),
        ]
        return pl.pallas_call(
            kernel,
            out_shape=jax.ShapeDtypeStruct((B_pad, dout), out_dtype),
            grid_spec=pltpu.PrefetchScalarGridSpec(
                num_scalar_prefetch=0,
                grid=grid,
                in_specs=in_specs,
                out_specs=pl.BlockSpec((batch_tile, dout), lambda i: (i, 0)),
            ),
            compiler_params=pltpu.CompilerParams(**cp_kwargs),
            cost_estimate=cost,
        )

    args = (x_pad, arrays["w_first"], arrays["b_first"], arrays["w_hid"],
            arrays["b_hid"], arrays["w_last"], arrays["b_last"])
    try:
        out = build(True)(*args)
    except Exception:
        # Fallback for JAX versions that reject pipeline_mode=pl.Buffered(1):
        # default double-buffered resident parameters (costs 2x param VMEM).
        out = build(False)(*args)

    if out.shape != (B, f_out):                # guarded no-op when unpadded
        out = out[:B, :f_out]
    return out


def init_params(key, input_size, hidden_size, output_size, num_hidden_layer,
                init0=False):
    """Init mimicking nn.Linear default (uniform +/- 1/sqrt(fan_in))."""
    sizes = [input_size] + [hidden_size] * num_hidden_layer
    layer_dims = list(zip(sizes[:-1], sizes[1:])) + [(hidden_size, output_size)]
    weights, biases = [], []
    for (fan_in, fan_out) in layer_dims:
        key, kw, kb = jax.random.split(key, 3)
        if init0:
            w = jnp.zeros((fan_in, fan_out), jnp.float32)
            b = jnp.zeros((fan_out,), jnp.float32)
        else:
            bound = 1.0 / (fan_in ** 0.5)
            w = jax.random.uniform(kw, (fan_in, fan_out), jnp.float32,
                                   minval=-bound, maxval=bound)
            b = jax.random.uniform(kb, (fan_out,), jnp.float32,
                                   minval=-bound, maxval=bound)
        weights.append(w)
        biases.append(b)
    return weights, biases


def reference_forward_f32(x, weights, biases):
    h = x
    for i in range(len(weights) - 1):
        h = jnp.maximum(h @ weights[i] + biases[i], 0.0)
    y = jnp.maximum(h @ weights[-1] + biases[-1], 0.0) + x
    return jax.nn.sigmoid(y)


def reference_forward_bf16(x, weights, biases):
    """Same numerics as the kernel: bf16 MXU operands, f32 accum/epilogue."""
    h = x
    y = None
    for i in range(len(weights)):
        z = jnp.dot(h.astype(jnp.bfloat16), weights[i].astype(jnp.bfloat16),
                    preferred_element_type=jnp.float32) + biases[i]
        if i < len(weights) - 1:
            h = jnp.maximum(z, 0.0)
        else:
            y = jnp.maximum(z, 0.0) + x
    return jax.nn.sigmoid(y)


if __name__ == "__main__":
    # Small shapes; residual requires output_size == input_size. Non-multiples
    # of 128 exercise the per-layer padding path; batch=256 gives the auto
    # batch_tile (32) an 8-step "parallel" grid.
    input_size = 100
    hidden_size = 96
    output_size = 100
    num_hidden_layer = 3
    batch = 256

    key = jax.random.PRNGKey(0)
    key, kx = jax.random.split(key)
    x = jax.random.normal(kx, (batch, input_size), jnp.float32)

    weights, biases = init_params(key, input_size, hidden_size, output_size,
                                  num_hidden_layer, init0=False)

    params = prepare_params(weights, biases)      # one-time pad/stack (hoisted)
    out = sys2net2_forward(x, params)
    out = jax.block_until_ready(out)

    ref_bf16 = reference_forward_bf16(x, weights, biases)
    ref_f32 = reference_forward_f32(x, weights, biases)

    assert out.shape == (batch, output_size)
    assert out.dtype == x.dtype
    assert bool(jnp.all(jnp.isfinite(out)))
    # Tight check vs a reference with identical bf16-matmul/f32-accum numerics.
    assert jnp.allclose(out, ref_bf16, atol=5e-3, rtol=0.0), \
        "mismatch vs bf16-matmul reference"
    # Loose check vs the full-f32 PyTorch-equivalent math.
    assert jnp.allclose(out, ref_f32, atol=3e-2, rtol=0.0), \
        "mismatch vs f32 reference"

    print("KERNEL_OK")
</pallas_src>

<mosaic_0001>
module attributes {stable_mosaic.version = 11 : i64} {
  func.func @_sys2net2_kernel(%arg0: i32, %arg1: memref<32x128xf32, #tpu.memory_space<vmem>>, %arg2: memref<128x128xbf16, #tpu.memory_space<vmem>>, %arg3: memref<1x128xf32, #tpu.memory_space<vmem>>, %arg4: memref<2x128x128xbf16, #tpu.memory_space<vmem>>, %arg5: memref<2x1x128xf32, #tpu.memory_space<vmem>>, %arg6: memref<128x128xbf16, #tpu.memory_space<vmem>>, %arg7: memref<1x128xf32, #tpu.memory_space<vmem>>, %arg8: memref<32x128xf32, #tpu.memory_space<vmem>>) attributes {dimension_semantics = [#tpu.dimension_semantics<parallel>], iteration_bounds = array<i64: 8>, scalar_prefetch = 0 : i64, scratch_operands = 0 : i64, tpu.core_type = #tpu.core_type<tc>, window_params = [{transform_indices = @transform_0, window_bounds = array<i64: 32, 128>}, {pipeline_mode = #tpu.pipeline_mode<synchronous>, transform_indices = @transform_1, window_bounds = array<i64: 128, 128>}, {pipeline_mode = #tpu.pipeline_mode<synchronous>, transform_indices = @transform_2, window_bounds = array<i64: 1, 128>}, {pipeline_mode = #tpu.pipeline_mode<synchronous>, transform_indices = @transform_3, window_bounds = array<i64: 2, 128, 128>}, {pipeline_mode = #tpu.pipeline_mode<synchronous>, transform_indices = @transform_4, window_bounds = array<i64: 2, 1, 128>}, {pipeline_mode = #tpu.pipeline_mode<synchronous>, transform_indices = @transform_5, window_bounds = array<i64: 128, 128>}, {pipeline_mode = #tpu.pipeline_mode<synchronous>, transform_indices = @transform_6, window_bounds = array<i64: 1, 128>}, {transform_indices = @transform_7, window_bounds = array<i64: 32, 128>}]} {
    %c0 = arith.constant 0 : index
    %c0_0 = arith.constant 0 : index
    %0 = vector.load %arg1[%c0, %c0_0] : memref<32x128xf32, #tpu.memory_space<vmem>>, vector<32x128xf32>
    %1 = arith.truncf %0 : vector<32x128xf32> to vector<32x128xbf16>
    %c0_1 = arith.constant 0 : index
    %c0_2 = arith.constant 0 : index
    %2 = vector.load %arg2[%c0_1, %c0_2] : memref<128x128xbf16, #tpu.memory_space<vmem>>, vector<128x128xbf16>
    %cst = arith.constant dense<0.000000e+00> : vector<32x128xf32>
    %3 = tpu.matmul %1, %2, %cst {dimension_numbers = #tpu.dot_dimension_numbers<[1], [0], [0], [1], [0, 0, 1, 1], [], []>} : vector<32x128xbf16>, vector<128x128xbf16>, vector<32x128xf32> -> vector<32x128xf32>
    %c0_3 = arith.constant 0 : index
    %c0_4 = arith.constant 0 : index
    %4 = vector.load %arg3[%c0_3, %c0_4] : memref<1x128xf32, #tpu.memory_space<vmem>>, vector<1x128xf32>
    %5 = vector.broadcast %4 : vector<1x128xf32> to vector<32x128xf32>
    %6 = arith.addf %3, %5 : vector<32x128xf32>
    %cst_5 = arith.constant 0.000000e+00 : f32
    %7 = vector.broadcast %cst_5 : f32 to vector<32x128xf32>
    %8 = arith.maximumf %6, %7 : vector<32x128xf32>
    %9 = arith.truncf %8 : vector<32x128xf32> to vector<32x128xbf16>
    %c0_6 = arith.constant 0 : index
    %c0_7 = arith.constant 0 : index
    %c0_8 = arith.constant 0 : index
    %10 = vector.load %arg4[%c0_6, %c0_7, %c0_8] : memref<2x128x128xbf16, #tpu.memory_space<vmem>>, vector<1x128x128xbf16>
    %11 = vector.shape_cast %10 : vector<1x128x128xbf16> to vector<128x128xbf16>
    %cst_9 = arith.constant dense<0.000000e+00> : vector<32x128xf32>
    %12 = tpu.matmul %9, %11, %cst_9 {dimension_numbers = #tpu.dot_dimension_numbers<[1], [0], [0], [1], [0, 0, 1, 1], [], []>} : vector<32x128xbf16>, vector<128x128xbf16>, vector<32x128xf32> -> vector<32x128xf32>
    %c0_10 = arith.constant 0 : index
    %c0_11 = arith.constant 0 : index
    %c0_12 = arith.constant 0 : index
    %13 = vector.load %arg5[%c0_10, %c0_11, %c0_12] : memref<2x1x128xf32, #tpu.memory_space<vmem>>, vector<1x1x128xf32>
    %14 = vector.shape_cast %13 : vector<1x1x128xf32> to vector<1x128xf32>
    %15 = vector.broadcast %14 : vector<1x128xf32> to vector<32x128xf32>
    %16 = arith.addf %12, %15 : vector<32x128xf32>
    %cst_13 = arith.constant 0.000000e+00 : f32
    %17 = vector.broadcast %cst_13 : f32 to vector<32x128xf32>
    %18 = arith.maximumf %16, %17 : vector<32x128xf32>
    %19 = arith.truncf %18 : vector<32x128xf32> to vector<32x128xbf16>
    %c1 = arith.constant 1 : index
    %c0_14 = arith.constant 0 : index
    %c0_15 = arith.constant 0 : index
    %20 = vector.load %arg4[%c1, %c0_14, %c0_15] : memref<2x128x128xbf16, #tpu.memory_space<vmem>>, vector<1x128x128xbf16>
    %21 = vector.shape_cast %20 : vector<1x128x128xbf16> to vector<128x128xbf16>
    %cst_16 = arith.constant dense<0.000000e+00> : vector<32x128xf32>
    %22 = tpu.matmul %19, %21, %cst_16 {dimension_numbers = #tpu.dot_dimension_numbers<[1], [0], [0], [1], [0, 0, 1, 1], [], []>} : vector<32x128xbf16>, vector<128x128xbf16>, vector<32x128xf32> -> vector<32x128xf32>
    %c1_17 = arith.constant 1 : index
    %c0_18 = arith.constant 0 : index
    %c0_19 = arith.constant 0 : index
    %23 = vector.load %arg5[%c1_17, %c0_18, %c0_19] : memref<2x1x128xf32, #tpu.memory_space<vmem>>, vector<1x1x128xf32>
    %24 = vector.shape_cast %23 : vector<1x1x128xf32> to vector<1x128xf32>
    %25 = vector.broadcast %24 : vector<1x128xf32> to vector<32x128xf32>
    %26 = arith.addf %22, %25 : vector<32x128xf32>
    %cst_20 = arith.constant 0.000000e+00 : f32
    %27 = vector.broadcast %cst_20 : f32 to vector<32x128xf32>
    %28 = arith.maximumf %26, %27 : vector<32x128xf32>
    %29 = arith.truncf %28 : vector<32x128xf32> to vector<32x128xbf16>
    %c0_21 = arith.constant 0 : index
    %c0_22 = arith.constant 0 : index
    %30 = vector.load %arg6[%c0_21, %c0_22] : memref<128x128xbf16, #tpu.memory_space<vmem>>, vector<128x128xbf16>
    %cst_23 = arith.constant dense<0.000000e+00> : vector<32x128xf32>
    %31 = tpu.matmul %29, %30, %cst_23 {dimension_numbers = #tpu.dot_dimension_numbers<[1], [0], [0], [1], [0, 0, 1, 1], [], []>} : vector<32x128xbf16>, vector<128x128xbf16>, vector<32x128xf32> -> vector<32x128xf32>
    %c0_24 = arith.constant 0 : index
    %c0_25 = arith.constant 0 : index
    %32 = vector.load %arg7[%c0_24, %c0_25] : memref<1x128xf32, #tpu.memory_space<vmem>>, vector<1x128xf32>
    %33 = vector.broadcast %32 : vector<1x128xf32> to vector<32x128xf32>
    %34 = arith.addf %31, %33 : vector<32x128xf32>
    %cst_26 = arith.constant 0.000000e+00 : f32
    %35 = vector.broadcast %cst_26 : f32 to vector<32x128xf32>
    %36 = arith.maximumf %34, %35 : vector<32x128xf32>
    %c0_27 = arith.constant 0 : index
    %c0_28 = arith.constant 0 : index
    %37 = vector.load %arg1[%c0_27, %c0_28] : memref<32x128xf32, #tpu.memory_space<vmem>>, vector<32x128xf32>
    %38 = arith.addf %36, %37 : vector<32x128xf32>
    %cst_29 = arith.constant 0.000000e+00 : f32
    %39 = vector.broadcast %cst_29 : f32 to vector<32x128xf32>
    %40 = arith.subf %39, %38 : vector<32x128xf32>
    %cst_30 = arith.constant 8.000000e+01 : f32
    %41 = vector.broadcast %cst_30 : f32 to vector<32x128xf32>
    %42 = arith.minimumf %40, %41 : vector<32x128xf32>
    %43 = math.exp %42 : vector<32x128xf32>
    %cst_31 = arith.constant 1.000000e+00 : f32
    %44 = vector.broadcast %cst_31 : f32 to vector<32x128xf32>
    %45 = arith.addf %44, %43 : vector<32x128xf32>
    %46 = tpu.reciprocal %45 : vector<32x128xf32> -> vector<32x128xf32>
    %c0_32 = arith.constant 0 : index
    %c0_33 = arith.constant 0 : index
    %47 = vector.load %arg8[%c0_32, %c0_33] : memref<32x128xf32, #tpu.memory_space<vmem>>, vector<32x128xf32>
    tpu.vector_store %arg8[%c0_32, %c0_33], %46 {strides = array<i32>} : memref<32x128xf32, #tpu.memory_space<vmem>>, vector<32x128xf32>,
    return
  }
  func.func @transform_0(%arg0: i32) -> (i32, i32) {
    %c0_i32 = arith.constant 0 : i32
    %c0_i32_0 = arith.constant 0 : i32
    return %arg0, %c0_i32 : i32, i32
  }
  func.func @transform_1(%arg0: i32) -> (i32, i32) {
    %c0_i32 = arith.constant 0 : i32
    %c0_i32_0 = arith.constant 0 : i32
    %c0_i32_1 = arith.constant 0 : i32
    return %c0_i32, %c0_i32_0 : i32, i32
  }
  func.func @transform_2(%arg0: i32) -> (i32, i32) {
    %c0_i32 = arith.constant 0 : i32
    %c0_i32_0 = arith.constant 0 : i32
    %c0_i32_1 = arith.constant 0 : i32
    return %c0_i32, %c0_i32_0 : i32, i32
  }
  func.func @transform_3(%arg0: i32) -> (i32, i32, i32) {
    %c0_i32 = arith.constant 0 : i32
    %c0_i32_0 = arith.constant 0 : i32
    %c0_i32_1 = arith.constant 0 : i32
    %c0_i32_2 = arith.constant 0 : i32
    return %c0_i32, %c0_i32_0, %c0_i32_1 : i32, i32, i32
  }
  func.func @transform_4(%arg0: i32) -> (i32, i32, i32) {
    %c0_i32 = arith.constant 0 : i32
    %c0_i32_0 = arith.constant 0 : i32
    %c0_i32_1 = arith.constant 0 : i32
    %c0_i32_2 = arith.constant 0 : i32
    return %c0_i32, %c0_i32_0, %c0_i32_1 : i32, i32, i32
  }
  func.func @transform_5(%arg0: i32) -> (i32, i32) {
    %c0_i32 = arith.constant 0 : i32
    %c0_i32_0 = arith.constant 0 : i32
    %c0_i32_1 = arith.constant 0 : i32
    return %c0_i32, %c0_i32_0 : i32, i32
  }
  func.func @transform_6(%arg0: i32) -> (i32, i32) {
    %c0_i32 = arith.constant 0 : i32
    %c0_i32_0 = arith.constant 0 : i32
    %c0_i32_1 = arith.constant 0 : i32
    return %c0_i32, %c0_i32_0 : i32, i32
  }
  func.func @transform_7(%arg0: i32) -> (i32, i32) {
    %c0_i32 = arith.constant 0 : i32
    %c0_i32_0 = arith.constant 0 : i32
    return %arg0, %c0_i32 : i32, i32
  }
}

module attributes {stable_mosaic.version = 11 : i64} {
  func.func @_sys2net2_kernel(%arg0: i32, %arg1: memref<32x128xf32, #tpu.memory_space<vmem>>, %arg2: memref<128x128xbf16, #tpu.memory_space<vmem>>, %arg3: memref<1x128xf32, #tpu.memory_space<vmem>>, %arg4: memref<2x128x128xbf16, #tpu.memory_space<vmem>>, %arg5: memref<2x1x128xf32, #tpu.memory_space<vmem>>, %arg6: memref<128x128xbf16, #tpu.memory_space<vmem>>, %arg7: memref<1x128xf32, #tpu.memory_space<vmem>>, %arg8: memref<32x128xf32, #tpu.memory_space<vmem>>) attributes {dimension_semantics = [#tpu.dimension_semantics<parallel>], iteration_bounds = array<i64: 8>, scalar_prefetch = 0 : i64, scratch_operands = 0 : i64, tpu.core_type = #tpu.core_type<tc>, window_params = [{transform_indices = @transform_0, window_bounds = array<i64: 32, 128>}, {pipeline_mode = #tpu.pipeline_mode<synchronous>, transform_indices = @transform_1, window_bounds = array<i64: 128, 128>}, {pipeline_mode = #tpu.pipeline_mode<synchronous>, transform_indices = @transform_2, window_bounds = array<i64: 1, 128>}, {pipeline_mode = #tpu.pipeline_mode<synchronous>, transform_indices = @transform_3, window_bounds = array<i64: 2, 128, 128>}, {pipeline_mode = #tpu.pipeline_mode<synchronous>, transform_indices = @transform_4, window_bounds = array<i64: 2, 1, 128>}, {pipeline_mode = #tpu.pipeline_mode<synchronous>, transform_indices = @transform_5, window_bounds = array<i64: 128, 128>}, {pipeline_mode = #tpu.pipeline_mode<synchronous>, transform_indices = @transform_6, window_bounds = array<i64: 1, 128>}, {transform_indices = @transform_7, window_bounds = array<i64: 32, 128>}]} {
    %c0 = arith.constant 0 : index
    %c0_0 = arith.constant 0 : index
    %0 = vector.load %arg1[%c0, %c0_0] : memref<32x128xf32, #tpu.memory_space<vmem>>, vector<32x128xf32>
    %1 = arith.truncf %0 : vector<32x128xf32> to vector<32x128xbf16>
    %c0_1 = arith.constant 0 : index
    %c0_2 = arith.constant 0 : index
    %2 = vector.load %arg2[%c0_1, %c0_2] : memref<128x128xbf16, #tpu.memory_space<vmem>>, vector<128x128xbf16>
    %cst = arith.constant dense<0.000000e+00> : vector<32x128xf32>
    %3 = tpu.matmul %1, %2, %cst {dimension_numbers = #tpu.dot_dimension_numbers<[1], [0], [0], [1], [0, 0, 1, 1], [], []>} : vector<32x128xbf16>, vector<128x128xbf16>, vector<32x128xf32> -> vector<32x128xf32>
    %c0_3 = arith.constant 0 : index
    %c0_4 = arith.constant 0 : index
    %4 = vector.load %arg3[%c0_3, %c0_4] : memref<1x128xf32, #tpu.memory_space<vmem>>, vector<1x128xf32>
    %5 = vector.broadcast %4 : vector<1x128xf32> to vector<32x128xf32>
    %6 = arith.addf %3, %5 : vector<32x128xf32>
    %cst_5 = arith.constant 0.000000e+00 : f32
    %7 = vector.broadcast %cst_5 : f32 to vector<32x128xf32>
    %8 = arith.maximumf %6, %7 : vector<32x128xf32>
    %9 = arith.truncf %8 : vector<32x128xf32> to vector<32x128xbf16>
    %c0_6 = arith.constant 0 : index
    %c0_7 = arith.constant 0 : index
    %c0_8 = arith.constant 0 : index
    %10 = vector.load %arg4[%c0_6, %c0_7, %c0_8] : memref<2x128x128xbf16, #tpu.memory_space<vmem>>, vector<1x128x128xbf16>
    %11 = vector.shape_cast %10 : vector<1x128x128xbf16> to vector<128x128xbf16>
    %cst_9 = arith.constant dense<0.000000e+00> : vector<32x128xf32>
    %12 = tpu.matmul %9, %11, %cst_9 {dimension_numbers = #tpu.dot_dimension_numbers<[1], [0], [0], [1], [0, 0, 1, 1], [], []>} : vector<32x128xbf16>, vector<128x128xbf16>, vector<32x128xf32> -> vector<32x128xf32>
    %c0_10 = arith.constant 0 : index
    %c0_11 = arith.constant 0 : index
    %c0_12 = arith.constant 0 : index
    %13 = vector.load %arg5[%c0_10, %c0_11, %c0_12] : memref<2x1x128xf32, #tpu.memory_space<vmem>>, vector<1x1x128xf32>
    %14 = vector.shape_cast %13 : vector<1x1x128xf32> to vector<1x128xf32>
    %15 = vector.broadcast %14 : vector<1x128xf32> to vector<32x128xf32>
    %16 = arith.addf %12, %15 : vector<32x128xf32>
    %cst_13 = arith.constant 0.000000e+00 : f32
    %17 = vector.broadcast %cst_13 : f32 to vector<32x128xf32>
    %18 = arith.maximumf %16, %17 : vector<32x128xf32>
    %19 = arith.truncf %18 : vector<32x128xf32> to vector<32x128xbf16>
    %c1 = arith.constant 1 : index
    %c0_14 = arith.constant 0 : index
    %c0_15 = arith.constant 0 : index
    %20 = vector.load %arg4[%c1, %c0_14, %c0_15] : memref<2x128x128xbf16, #tpu.memory_space<vmem>>, vector<1x128x128xbf16>
    %21 = vector.shape_cast %20 : vector<1x128x128xbf16> to vector<128x128xbf16>
    %cst_16 = arith.constant dense<0.000000e+00> : vector<32x128xf32>
    %22 = tpu.matmul %19, %21, %cst_16 {dimension_numbers = #tpu.dot_dimension_numbers<[1], [0], [0], [1], [0, 0, 1, 1], [], []>} : vector<32x128xbf16>, vector<128x128xbf16>, vector<32x128xf32> -> vector<32x128xf32>
    %c1_17 = arith.constant 1 : index
    %c0_18 = arith.constant 0 : index
    %c0_19 = arith.constant 0 : index
    %23 = vector.load %arg5[%c1_17, %c0_18, %c0_19] : memref<2x1x128xf32, #tpu.memory_space<vmem>>, vector<1x1x128xf32>
    %24 = vector.shape_cast %23 : vector<1x1x128xf32> to vector<1x128xf32>
    %25 = vector.broadcast %24 : vector<1x128xf32> to vector<32x128xf32>
    %26 = arith.addf %22, %25 : vector<32x128xf32>
    %cst_20 = arith.constant 0.000000e+00 : f32
    %27 = vector.broadcast %cst_20 : f32 to vector<32x128xf32>
    %28 = arith.maximumf %26, %27 : vector<32x128xf32>
    %29 = arith.truncf %28 : vector<32x128xf32> to vector<32x128xbf16>
    %c0_21 = arith.constant 0 : index
    %c0_22 = arith.constant 0 : index
    %30 = vector.load %arg6[%c0_21, %c0_22] : memref<128x128xbf16, #tpu.memory_space<vmem>>, vector<128x128xbf16>
    %cst_23 = arith.constant dense<0.000000e+00> : vector<32x128xf32>
    %31 = tpu.matmul %29, %30, %cst_23 {dimension_numbers = #tpu.dot_dimension_numbers<[1], [0], [0], [1], [0, 0, 1, 1], [], []>} : vector<32x128xbf16>, vector<128x128xbf16>, vector<32x128xf32> -> vector<32x128xf32>
    %c0_24 = arith.constant 0 : index
    %c0_25 = arith.constant 0 : index
    %32 = vector.load %arg7[%c0_24, %c0_25] : memref<1x128xf32, #tpu.memory_space<vmem>>, vector<1x128xf32>
    %33 = vector.broadcast %32 : vector<1x128xf32> to vector<32x128xf32>
    %34 = arith.addf %31, %33 : vector<32x128xf32>
    %cst_26 = arith.constant 0.000000e+00 : f32
    %35 = vector.broadcast %cst_26 : f32 to vector<32x128xf32>
    %36 = arith.maximumf %34, %35 : vector<32x128xf32>
    %c0_27 = arith.constant 0 : index
    %c0_28 = arith.constant 0 : index
    %37 = vector.load %arg1[%c0_27, %c0_28] : memref<32x128xf32, #tpu.memory_space<vmem>>, vector<32x128xf32>
    %38 = arith.addf %36, %37 : vector<32x128xf32>
    %cst_29 = arith.constant 0.000000e+00 : f32
    %39 = vector.broadcast %cst_29 : f32 to vector<32x128xf32>
    %40 = arith.subf %39, %38 : vector<32x128xf32>
    %cst_30 = arith.constant 8.000000e+01 : f32
    %41 = vector.broadcast %cst_30 : f32 to vector<32x128xf32>
    %42 = arith.minimumf %40, %41 : vector<32x128xf32>
    %43 = math.exp %42 : vector<32x128xf32>
    %cst_31 = arith.constant 1.000000e+00 : f32
    %44 = vector.broadcast %cst_31 : f32 to vector<32x128xf32>
    %45 = arith.addf %44, %43 : vector<32x128xf32>
    %46 = tpu.reciprocal %45 : vector<32x128xf32> -> vector<32x128xf32>
    %c0_32 = arith.constant 0 : index
    %c0_33 = arith.constant 0 : index
    %47 = vector.load %arg8[%c0_32, %c0_33] : memref<32x128xf32, #tpu.memory_space<vmem>>, vector<32x128xf32>
    tpu.vector_store %arg8[%c0_32, %c0_33], %46 {strides = array<i32>} : memref<32x128xf32, #tpu.memory_space<vmem>>, vector<32x128xf32>,
    return
  }
  func.func @transform_0(%arg0: i32) -> (i32, i32) {
    %c0_i32 = arith.constant 0 : i32
    %c0_i32_0 = arith.constant 0 : i32
    return %arg0, %c0_i32 : i32, i32
  }
  func.func @transform_1(%arg0: i32) -> (i32, i32) {
    %c0_i32 = arith.constant 0 : i32
    %c0_i32_0 = arith.constant 0 : i32
    %c0_i32_1 = arith.constant 0 : i32
    return %c0_i32, %c0_i32_0 : i32, i32
  }
  func.func @transform_2(%arg0: i32) -> (i32, i32) {
    %c0_i32 = arith.constant 0 : i32
    %c0_i32_0 = arith.constant 0 : i32
    %c0_i32_1 = arith.constant 0 : i32
    return %c0_i32, %c0_i32_0 : i32, i32
  }
  func.func @transform_3(%arg0: i32) -> (i32, i32, i32) {
    %c0_i32 = arith.constant 0 : i32
    %c0_i32_0 = arith.constant 0 : i32
    %c0_i32_1 = arith.constant 0 : i32
    %c0_i32_2 = arith.constant 0 : i32
    return %c0_i32, %c0_i32_0, %c0_i32_1 : i32, i32, i32
  }
  func.func @transform_4(%arg0: i32) -> (i32, i32, i32) {
    %c0_i32 = arith.constant 0 : i32
    %c0_i32_0 = arith.constant 0 : i32
    %c0_i32_1 = arith.constant 0 : i32
    %c0_i32_2 = arith.constant 0 : i32
    return %c0_i32, %c0_i32_0, %c0_i32_1 : i32, i32, i32
  }
  func.func @transform_5(%arg0: i32) -> (i32, i32) {
    %c0_i32 = arith.constant 0 : i32
    %c0_i32_0 = arith.constant 0 : i32
    %c0_i32_1 = arith.constant 0 : i32
    return %c0_i32, %c0_i32_0 : i32, i32
  }
  func.func @transform_6(%arg0: i32) -> (i32, i32) {
    %c0_i32 = arith.constant 0 : i32
    %c0_i32_0 = arith.constant 0 : i32
    %c0_i32_1 = arith.constant 0 : i32
    return %c0_i32, %c0_i32_0 : i32, i32
  }
  func.func @transform_7(%arg0: i32) -> (i32, i32) {
    %c0_i32 = arith.constant 0 : i32
    %c0_i32_0 = arith.constant 0 : i32
    return %arg0, %c0_i32 : i32, i32
  }
}

</mosaic_0001>

<llo_original>
// kernel: tpu_custom_call.1
$region0: #{tpu_custom_call.1}
  #allocation0 [shape = 'u32[]', space=smem, size = 0x4, offset = 0x4, fixed_abs, tag = 'smem constant byte address 0x4 - core index']
  #allocation1 [shape = 'u32[144,128]{1,0:T(1,128)}', space=vmem, size = 0x12000, scoped, tag = 'internal scratch']
  %s0 = inlined_call_operand.hbm [shape: f32[256,128], index: 0, kind: input, shape index: {}]
  %s1 = inlined_call_operand.hbm [shape: bf16[128,128], index: 1, kind: input, shape index: {}]
  %s2 = inlined_call_operand.vmem [shape: f32[1,128], index: 2, kind: input, shape index: {}]
  %s3 = inlined_call_operand.hbm [shape: bf16[2,128,128], index: 3, kind: input, shape index: {}]
  %s4 = inlined_call_operand.vmem [shape: f32[2,1,128], index: 4, kind: input, shape index: {}]
  %s5 = inlined_call_operand.hbm [shape: bf16[128,128], index: 5, kind: input, shape index: {}]
  %s6 = inlined_call_operand.vmem [shape: f32[1,128], index: 6, kind: input, shape index: {}]
  %s7 = inlined_call_operand.hbm [shape: f32[256,128], index: 7, kind: output, shape index: {}]
  %s8 = sld [smem:[#allocation0]]
  $region77: #{tpu_custom_call.1} parent=0
    _
  %s10 = ssub.s32 1, %s8
  %s11 = scalar_select 0, %s10, %s8
  $region1: #{tpu_custom_call.1} parent=0
    #allocation2 [shape = 'u8[32768]{0}', space=vmem, size = 0x8000, scoped, tag = 'input window, operand 0']
    #allocation3 [shape = 's32[2]{0}', space=sflag, size = 0x8, scoped, tag = 'scoped memory for tpu_custom_call.1']
    #allocation4 [shape = 's32[2]{0}', space=sflag, size = 0x8, scoped, tag = 'scoped memory for tpu_custom_call.1']
    #allocation5 [shape = 'u8[32768]{0}', space=vmem, size = 0x8000, scoped, tag = 'input window, operand 1, single buffered']
    #allocation6 [shape = 's32[1]{0}', space=sflag, size = 0x4, scoped, tag = 'scoped memory for tpu_custom_call.1']
    #allocation7 [shape = 'u8[65536]{0}', space=vmem, size = 0x10000, scoped, tag = 'input window, operand 3, single buffered']
    #allocation8 [shape = 'u8[32768]{0}', space=vmem, size = 0x8000, scoped, tag = 'input window, operand 5, single buffered']
    #allocation9 [shape = 's32[1]{0}', space=sflag, size = 0x4, scoped, tag = 'scoped memory for tpu_custom_call.1']
    #allocation10 [shape = 'u8[32768]{0}', space=vmem, size = 0x8000, scoped, tag = 'output window, operand 0']
    %12 = vsyncpa [#allocation3], 0
    %s13 = scalar_lea.sflag [#allocation3], 1
    %14 = vsyncpa %s13, 0
    %15 = vsyncpa [#allocation6], 0
    %16 = vsyncpa [#allocation9], 0
    %17 = vsyncpa [#allocation4], 0
    %s18 = scalar_lea.sflag [#allocation4], 1
    %19 = vsyncpa %s18, 0
    loop: start=0, step=1, limit=10
    $region2: #{tpu_custom_call.1} parent=1 // loop_pre_header
      _
    $region3: #{tpu_custom_call.1} parent=1 // loop_header
      %s21 = sphi 0, %s25
      %p22 = scmp.ge.s32.totalorder %s21, 10
      %s31 = sphi 0, %s33
      %s34 = sphi 0, %s31
      %s35 = sphi 0, %s34
      %s51 = sphi 0, %s35
      %s55 = sphi 0, %s55
      %s57 = sphi 0, %s55
      %s58 = sphi 0, %s57
      %s72 = sphi 0, %s58
      %s76 = sphi 0, %s76
      %s78 = sphi 0, %s76
      %s79 = sphi 0, %s78
      %s93 = sphi 0, %s79
      %s97 = sphi 0, %s97
      %s99 = sphi 0, %s97
      %s100 = sphi 0, %s99
      %s114 = sphi 0, %s100
      %s118 = sphi 0, %s118
      %s120 = sphi 0, %s118
      %s121 = sphi 0, %s120
      %s135 = sphi 0, %s121
      %s139 = sphi 0, %s139
      %s141 = sphi 0, %s139
      %s142 = sphi 0, %s141
      %s156 = sphi 0, %s142
      %s160 = sphi 0, %s160
      %s162 = sphi 0, %s160
      %s163 = sphi 0, %s162
      %s177 = sphi 0, %s163
      %s183 = sphi 0, %s185
      %s186 = sphi 0, %s183
      %s187 = sphi 0, %s186
      %s203 = sphi 0, %s187
    $region4: #{tpu_custom_call.1} parent=1 // loop_header_branch
      %24 = sbr.rel (%p22) target = $region8
    $region5: #{tpu_custom_call.1} parent=1 // loop_body
      %s26 = ssub.s32 %s21, 1
      %s27 = ssub.s32 %s21, 2
      %s28 = sadd.s32 %s21, 1
      %s29 = ssub.s32 %s21, %s28
      %p30 = scmp.eq.s32.totalorder %s29, 0
      %s32 = sadd.s32 %s31, 1
      %s33 = scalar_select %p30, %s31, %s32
      %p36 = pneg %p30
      %p37 = scmp.eq.s32.totalorder %s21, 7
      %p38 = por %p36, %p37
      %p39 = scmp.ne.s32.totalorder %s31, %s34
      %p40 = scmp.eq.s32.totalorder %s21, 0
      %p41 = por %p39, %p40
      %p42 = scmp.ne.s32.totalorder %s31, %s34
      %p43 = scmp.eq.s32.totalorder %s26, 7
      %p44 = por %p42, %p43
      %p45 = scmp.ne.s32.totalorder %s34, %s35
      %p46 = scmp.eq.s32.totalorder %s26, 0
      %p47 = por %p45, %p46
      %p48 = scmp.ne.s32.totalorder %s34, %s35
      %p49 = scmp.eq.s32.totalorder %s27, 7
      %p50 = por %p48, %p49
      %p52 = scmp.ne.s32.totalorder %s35, %s51
      %p53 = scmp.eq.s32.totalorder %s27, 0
      %p54 = por %p52, %p53
      %s56 = sadd.s32 %s55, 1
      %p59 = scmp.eq.s32.totalorder %s21, 7
      %p60 = scmp.ne.s32.totalorder %s55, %s57
      %p61 = scmp.eq.s32.totalorder %s21, 0
      %p62 = por %p60, %p61
      %p63 = scmp.ne.s32.totalorder %s55, %s57
      %p64 = scmp.eq.s32.totalorder %s26, 7
      %p65 = por %p63, %p64
      %p66 = scmp.ne.s32.totalorder %s57, %s58
      %p67 = scmp.eq.s32.totalorder %s26, 0
      %p68 = por %p66, %p67
      %p69 = scmp.ne.s32.totalorder %s57, %s58
      %p70 = scmp.eq.s32.totalorder %s27, 7
      %p71 = por %p69, %p70
      %p73 = scmp.ne.s32.totalorder %s58, %s72
      %p74 = scmp.eq.s32.totalorder %s27, 0
      %p75 = por %p73, %p74
      %s77 = sadd.s32 %s76, 1
      %p80 = scmp.eq.s32.totalorder %s21, 7
      %p81 = scmp.ne.s32.totalorder %s76, %s78
      %p82 = scmp.eq.s32.totalorder %s21, 0
      %p83 = por %p81, %p82
      %p84 = scmp.ne.s32.totalorder %s76, %s78
      %p85 = scmp.eq.s32.totalorder %s26, 7
      %p86 = por %p84, %p85
      %p87 = scmp.ne.s32.totalorder %s78, %s79
      %p88 = scmp.eq.s32.totalorder %s26, 0
      %p89 = por %p87, %p88
      %p90 = scmp.ne.s32.totalorder %s78, %s79
      %p91 = scmp.eq.s32.totalorder %s27, 7
      %p92 = por %p90, %p91
      %p94 = scmp.ne.s32.totalorder %s79, %s93
      %p95 = scmp.eq.s32.totalorder %s27, 0
      %p96 = por %p94, %p95
      %s98 = sadd.s32 %s97, 1
      %p101 = scmp.eq.s32.totalorder %s21, 7
      %p102 = scmp.ne.s32.totalorder %s97, %s99
      %p103 = scmp.eq.s32.totalorder %s21, 0
      %p104 = por %p102, %p103
      %p105 = scmp.ne.s32.totalorder %s97, %s99
      %p106 = scmp.eq.s32.totalorder %s26, 7
      %p107 = por %p105, %p106
      %p108 = scmp.ne.s32.totalorder %s99, %s100
      %p109 = scmp.eq.s32.totalorder %s26, 0
      %p110 = por %p108, %p109
      %p111 = scmp.ne.s32.totalorder %s99, %s100
      %p112 = scmp.eq.s32.totalorder %s27, 7
      %p113 = por %p111, %p112
      %p115 = scmp.ne.s32.totalorder %s100, %s114
      %p116 = scmp.eq.s32.totalorder %s27, 0
      %p117 = por %p115, %p116
      %s119 = sadd.s32 %s118, 1
      %p122 = scmp.eq.s32.totalorder %s21, 7
      %p123 = scmp.ne.s32.totalorder %s118, %s120
      %p124 = scmp.eq.s32.totalorder %s21, 0
      %p125 = por %p123, %p124
      %p126 = scmp.ne.s32.totalorder %s118, %s120
      %p127 = scmp.eq.s32.totalorder %s26, 7
      %p128 = por %p126, %p127
      %p129 = scmp.ne.s32.totalorder %s120, %s121
      %p130 = scmp.eq.s32.totalorder %s26, 0
      %p131 = por %p129, %p130
      %p132 = scmp.ne.s32.totalorder %s120, %s121
      %p133 = scmp.eq.s32.totalorder %s27, 7
      %p134 = por %p132, %p133
      %p136 = scmp.ne.s32.totalorder %s121, %s135
      %p137 = scmp.eq.s32.totalorder %s27, 0
      %p138 = por %p136, %p137
      %s140 = sadd.s32 %s139, 1
      %p143 = scmp.eq.s32.totalorder %s21, 7
      %p144 = scmp.ne.s32.totalorder %s139, %s141
      %p145 = scmp.eq.s32.totalorder %s21, 0
      %p146 = por %p144, %p145
      %p147 = scmp.ne.s32.totalorder %s139, %s141
      %p148 = scmp.eq.s32.totalorder %s26, 7
      %p149 = por %p147, %p148
      %p150 = scmp.ne.s32.totalorder %s141, %s142
      %p151 = scmp.eq.s32.totalorder %s26, 0
      %p152 = por %p150, %p151
      %p153 = scmp.ne.s32.totalorder %s141, %s142
      %p154 = scmp.eq.s32.totalorder %s27, 7
      %p155 = por %p153, %p154
      %p157 = scmp.ne.s32.totalorder %s142, %s156
      %p158 = scmp.eq.s32.totalorder %s27, 0
      %p159 = por %p157, %p158
      %s161 = sadd.s32 %s160, 1
      %p164 = scmp.eq.s32.totalorder %s21, 7
      %p165 = scmp.ne.s32.totalorder %s160, %s162
      %p166 = scmp.eq.s32.totalorder %s21, 0
      %p167 = por %p165, %p166
      %p168 = scmp.ne.s32.totalorder %s160, %s162
      %p169 = scmp.eq.s32.totalorder %s26, 7
      %p170 = por %p168, %p169
      %p171 = scmp.ne.s32.totalorder %s162, %s163
      %p172 = scmp.eq.s32.totalorder %s26, 0
      %p173 = por %p171, %p172
      %p174 = scmp.ne.s32.totalorder %s162, %s163
      %p175 = scmp.eq.s32.totalorder %s27, 7
      %p176 = por %p174, %p175
      %p178 = scmp.ne.s32.totalorder %s163, %s177
      %p179 = scmp.eq.s32.totalorder %s27, 0
      %p180 = por %p178, %p179
      %s181 = ssub.s32 %s21, %s28
      %p182 = scmp.eq.s32.totalorder %s181, 0
      %s184 = sadd.s32 %s183, 1
      %s185 = scalar_select %p182, %s183, %s184
      %p188 = pneg %p182
      %p189 = scmp.eq.s32.totalorder %s21, 7
      %p190 = por %p188, %p189
      %p191 = scmp.ne.s32.totalorder %s183, %s186
      %p192 = scmp.eq.s32.totalorder %s21, 0
      %p193 = por %p191, %p192
      %p194 = scmp.ne.s32.totalorder %s183, %s186
      %p195 = scmp.eq.s32.totalorder %s26, 7
      %p196 = por %p194, %p195
      %p197 = scmp.ne.s32.totalorder %s186, %s187
      %p198 = scmp.eq.s32.totalorder %s26, 0
      %p199 = por %p197, %p198
      %p200 = scmp.ne.s32.totalorder %s186, %s187
      %p201 = scmp.eq.s32.totalorder %s27, 7
      %p202 = por %p200, %p201
      %p204 = scmp.ne.s32.totalorder %s187, %s203
      %p205 = scmp.eq.s32.totalorder %s27, 0
      %p206 = por %p204, %p205
      %p207 = scmp.le.s32.totalorder 1, %s21
      %p208 = scmp.lt.s32.totalorder %s21, 9
      %p209 = pnand %p207, %p208
      %p210 = pneg %p209
      // Predicated region
      $region9: #{tpu_custom_call.1} parent=5 // pred_check
        _
      $region10: #{tpu_custom_call.1} parent=5 // pred_check_branch
        %212 = sbr.rel (%p209) target = $region12
      $region11: #{tpu_custom_call.1} parent=5 // pred_region
        %s213 = ssub.s32 %s21, 1
        // Predicated region
        $region13: #{tpu_custom_call.1} parent=11 // pred_check
          %p214 = pneg %p68
        $region14: #{tpu_custom_call.1} parent=11 // pred_check_branch
          %216 = sbr.rel (%p214) target = $region16
        $region15: #{tpu_custom_call.1} parent=11 // pred_region
          %s218 = ssub.s32 1024, 1024
          %219 = vsyncadd [#allocation6], %s218
          %s220 = sshll.u32 [#allocation5], 4
          %s221 = int_to_ptr.vmem [resolvable:$true] %s220
          %226 = dma.hbm_to_vmem [thread:$0]  %s1, 1024, %s221, [#allocation6], 64, 64, 4
        $region16: #{tpu_custom_call.1} parent=11 // pred_fallthru
          _
        // Predicated region
        $region17: #{tpu_custom_call.1} parent=11 // pred_check
          %p227 = pneg %p89
        $region18: #{tpu_custom_call.1} parent=11 // pred_check_branch
          %229 = sbr.rel (%p227) target = $region20
        $region19: #{tpu_custom_call.1} parent=11 // pred_region
          _
        $region20: #{tpu_custom_call.1} parent=11 // pred_fallthru
          _
        // Predicated region
        $region21: #{tpu_custom_call.1} parent=11 // pred_check
          %p230 = pneg %p110
        $region22: #{tpu_custom_call.1} parent=11 // pred_check_branch
          %232 = sbr.rel (%p230) target = $region24
        $region23: #{tpu_custom_call.1} parent=11 // pred_region
          %s234 = ssub.s32 2048, 2048
          %235 = vsyncadd [#allocation6], %s234
          %s236 = sshll.u32 [#allocation7], 4
          %s237 = int_to_ptr.vmem [resolvable:$true] %s236
          %242 = dma.hbm_to_vmem [thread:$0]  %s3, 2048, %s237, [#allocation6], 64, 64, 4
        $region24: #{tpu_custom_call.1} parent=11 // pred_fallthru
          _
        // Predicated region
        $region25: #{tpu_custom_call.1} parent=11 // pred_check
          %p243 = pneg %p131
        $region26: #{tpu_custom_call.1} parent=11 // pred_check_branch
          %245 = sbr.rel (%p243) target = $region28
        $region27: #{tpu_custom_call.1} parent=11 // pred_region
          _
        $region28: #{tpu_custom_call.1} parent=11 // pred_fallthru
          _
        // Predicated region
        $region29: #{tpu_custom_call.1} parent=11 // pred_check
          %p246 = pneg %p152
        $region30: #{tpu_custom_call.1} parent=11 // pred_check_branch
          %248 = sbr.rel (%p246) target = $region32
        $region31: #{tpu_custom_call.1} parent=11 // pred_region
          %s250 = ssub.s32 1024, 1024
          %251 = vsyncadd [#allocation9], %s250
          %s252 = sshll.u32 [#allocation8], 4
          %s253 = int_to_ptr.vmem [resolvable:$true] %s252
          %258 = dma.hbm_to_vmem [thread:$0]  %s5, 1024, %s253, [#allocation9], 64, 64, 4
        $region32: #{tpu_custom_call.1} parent=11 // pred_fallthru
          _
        // Predicated region
        $region33: #{tpu_custom_call.1} parent=11 // pred_check
          %p259 = pneg %p173
        $region34: #{tpu_custom_call.1} parent=11 // pred_check_branch
          %261 = sbr.rel (%p259) target = $region36
        $region35: #{tpu_custom_call.1} parent=11 // pred_region
          _
        $region36: #{tpu_custom_call.1} parent=11 // pred_fallthru
          _
      $region12: #{tpu_custom_call.1} parent=5 // pred_fallthru
        _
      %p262 = scmp.lt.s32.totalorder %s21, 8
      // Predicated region
      $region37: #{tpu_custom_call.1} parent=5 // pred_check
        %p263 = pneg %p262
      $region38: #{tpu_custom_call.1} parent=5 // pred_check_branch
        %265 = sbr.rel (%p263) target = $region40
      $region39: #{tpu_custom_call.1} parent=5 // pred_region
        // Predicated region
        $region41: #{tpu_custom_call.1} parent=39 // pred_check
          %p266 = pneg %p41
        $region42: #{tpu_custom_call.1} parent=39 // pred_check_branch
          %268 = sbr.rel (%p266) target = $region44
        $region43: #{tpu_custom_call.1} parent=39 // pred_region
          %s269 = sand.u32 %s31, 1
          %s270 = scalar_lea.sflag [#allocation3], %s269
          %s271 = sand.u32 %s31, 1
          %s272 = smul.addr %s271, 32
          %s273 = scalar_lea.vmem [#allocation2], %s272
          %s274 = smul.u32 4, %s21
          %s276 = ssub.s32 512, 512
          %277 = vsyncadd %s270, %s276
          %s278 = smul.addr %s274, 128
          %s279 = scalar_lea.hbm %s0, %s278
          %s280 = sshll.u32 %s273, 4
          %s281 = int_to_ptr.vmem [resolvable:$true] %s280
          %286 = dma.hbm_to_vmem [thread:$0]  %s279, 512, %s281, %s270, 128, 128, 8
        $region44: #{tpu_custom_call.1} parent=39 // pred_fallthru
          _
      $region40: #{tpu_custom_call.1} parent=5 // pred_fallthru
        _
      %p287 = scmp.le.s32.totalorder 1, %s21
      %p288 = scmp.lt.s32.totalorder %s21, 9
      %p289 = pnand %p287, %p288
      %p290 = pneg %p289
      // Predicated region
      $region45: #{tpu_custom_call.1} parent=5 // pred_check
        _
      $region46: #{tpu_custom_call.1} parent=5 // pred_check_branch
        %292 = sbr.rel (%p289) target = $region48
      $region47: #{tpu_custom_call.1} parent=5 // pred_region
        %s293 = ssub.s32 %s21, 1
        %s294 = sand.u32 %s34, 1
        %s295 = scalar_lea.sflag [#allocation3], %s294
        %s296 = sand.u32 %s34, 1
        %s297 = smul.addr %s296, 32
        %s298 = scalar_lea.vmem [#allocation2], %s297
        // Predicated region
        $region49: #{tpu_custom_call.1} parent=47 // pred_check
          %p299 = pneg %p47
        $region50: #{tpu_custom_call.1} parent=47 // pred_check_branch
          %301 = sbr.rel (%p299) target = $region52
        $region51: #{tpu_custom_call.1} parent=47 // pred_region
          %302 = dma.done %s295, 512
        $region52: #{tpu_custom_call.1} parent=47 // pred_fallthru
          _
        // Predicated region
        $region53: #{tpu_custom_call.1} parent=47 // pred_check
          %p303 = pneg %p68
        $region54: #{tpu_custom_call.1} parent=47 // pred_check_branch
          %305 = sbr.rel (%p303) target = $region56
        $region55: #{tpu_custom_call.1} parent=47 // pred_region
          %306 = dma.done [#allocation6], 1024
        $region56: #{tpu_custom_call.1} parent=47 // pred_fallthru
          _
        // Predicated region
        $region57: #{tpu_custom_call.1} parent=47 // pred_check
          %p307 = pneg %p110
        $region58: #{tpu_custom_call.1} parent=47 // pred_check_branch
          %309 = sbr.rel (%p307) target = $region60
        $region59: #{tpu_custom_call.1} parent=47 // pred_region
          %310 = dma.done [#allocation6], 2048
        $region60: #{tpu_custom_call.1} parent=47 // pred_fallthru
          _
        // Predicated region
        $region61: #{tpu_custom_call.1} parent=47 // pred_check
          %p311 = pneg %p152
        $region62: #{tpu_custom_call.1} parent=47 // pred_check_branch
          %313 = sbr.rel (%p311) target = $region64
        $region63: #{tpu_custom_call.1} parent=47 // pred_region
          %314 = dma.done [#allocation9], 1024
        $region64: #{tpu_custom_call.1} parent=47 // pred_fallthru
          _
        %s315 = sand.u32 %s34, 1
        %s316 = scalar_lea.sflag [#allocation3], %s315
        %s317 = sand.u32 %s34, 1
        %s318 = smul.addr %s317, 32
        %s319 = scalar_lea.vmem [#allocation2], %s318
        %p320 = pneg %p47
        %p321 = pneg %p44
        %p322 = pneg %p68
        %p323 = pneg %p65
        %p324 = pneg %p89
        %p325 = pneg %p86
        %p326 = pneg %p110
        %p327 = pneg %p107
        %p328 = pneg %p131
        %p329 = pneg %p128
        %p330 = pneg %p152
        %p331 = pneg %p149
        %p332 = pneg %p173
        %p333 = pneg %p170
        %p334 = pneg %p199
        %p335 = pneg %p196
        %s336 = sand.u32 %s186, 1
        %s337 = scalar_lea.sflag [#allocation4], %s336
        %s338 = sand.u32 %s186, 1
        %s339 = smul.addr %s338, 32
        %s340 = scalar_lea.vmem [#allocation10], %s339
        %s341 = smul.u32 4, %s26
        %s342 = smul.u32 4, %s26
        %v344 = vld [vmem:[%s298] sm:$0xff]
        %v345 = vld [vmem:[%s298 + $0x8] sm:$0xff]
        %v346 = vld [vmem:[%s298 + $0x10] sm:$0xff]
        %v347 = vld [vmem:[%s298 + $0x18] sm:$0xff]
        %v348 = vpack.c.bf16 %v345, %v344
        %v349 = vpack.c.bf16 %v347, %v346
        %v350 = vld [vmem:[#allocation5] sm:$0xf]
        %v351 = vld [vmem:[#allocation5 + $0x4] sm:$0xf]
        %v352 = vld [vmem:[#allocation5 + $0x8] sm:$0xf]
        %v353 = vld [vmem:[#allocation5 + $0xc] sm:$0xf]
        %v354 = vld [vmem:[#allocation5 + $0x10] sm:$0xf]
        %v355 = vld [vmem:[#allocation5 + $0x14] sm:$0xf]
        %v356 = vld [vmem:[#allocation5 + $0x18] sm:$0xf]
        %v357 = vld [vmem:[#allocation5 + $0x1c] sm:$0xf]
        %v358 = vld [vmem:[#allocation5 + $0x20] sm:$0xf]
        %v359 = vld [vmem:[#allocation5 + $0x24] sm:$0xf]
        %v360 = vld [vmem:[#allocation5 + $0x28] sm:$0xf]
        %v361 = vld [vmem:[#allocation5 + $0x2c] sm:$0xf]
        %v362 = vld [vmem:[#allocation5 + $0x30] sm:$0xf]
        %v363 = vld [vmem:[#allocation5 + $0x34] sm:$0xf]
        %v364 = vld [vmem:[#allocation5 + $0x38] sm:$0xf]
        %v365 = vld [vmem:[#allocation5 + $0x3c] sm:$0xf]
        %v366 = vld [vmem:[%s2] sm:$0x1]
        %v368 = vlaneseq
        %v369 = vshrl.u32 %v368, 7
        %v370 = vsub.s32 0, %v369
        %v371 = vrot.slane %v366, %v370
        %v389 = vunpack.c.l.b16 %v350
        %v390 = vunpack.c.l.b16 %v351
        %v391 = vunpack.c.l.b16 %v352
        %v392 = vunpack.c.l.b16 %v353
        %v393 = vunpack.c.l.b16 %v354
        %v394 = vunpack.c.l.b16 %v355
        %v395 = vunpack.c.l.b16 %v356
        %v396 = vunpack.c.l.b16 %v357
        %v397 = vunpack.c.l.b16 %v358
        %v398 = vunpack.c.l.b16 %v359
        %v399 = vunpack.c.l.b16 %v360
        %v400 = vunpack.c.l.b16 %v361
        %v401 = vunpack.c.l.b16 %v362
        %v402 = vunpack.c.l.b16 %v363
        %v403 = vunpack.c.l.b16 %v364
        %v404 = vunpack.c.l.b16 %v365
        %v405 = vpack.c.b16 %v390, %v389
        %v406 = vpack.c.b16 %v392, %v391
        %v407 = vpack.c.b16 %v394, %v393
        %v408 = vpack.c.b16 %v396, %v395
        %v409 = vpack.c.b16 %v398, %v397
        %v410 = vpack.c.b16 %v400, %v399
        %v411 = vpack.c.b16 %v402, %v401
        %v412 = vpack.c.b16 %v404, %v403
        %421 = vmatprep.subr.bf16.mxu0 0
        %422 = vmatpush1.bf16.msra.mxu0 %v405
        %423 = vmatprep.subr.bf16.mxu0 0
        %424 = vmatpush1.bf16.msra.mxu0 %v406
        %425 = vmatprep.subr.bf16.mxu0 0
        %426 = vmatpush1.bf16.msra.mxu0 %v407
        %427 = vmatprep.subr.bf16.mxu0 0
        %428 = vmatpush1.bf16.msra.mxu0 %v408
        %429 = vmatprep.subr.bf16.mxu0 0
        %430 = vmatpush1.bf16.msra.mxu0 %v409
        %431 = vmatprep.subr.bf16.mxu0 0
        %432 = vmatpush1.bf16.msra.mxu0 %v410
        %433 = vmatprep.subr.bf16.mxu0 0
        %434 = vmatpush1.bf16.msra.mxu0 %v411
        %435 = vmatprep.subr.bf16.mxu0 0
        %436 = vmatpush1.bf16.msra.mxu0 %v412
        %437 = vmatprep.subr.bf16.mxu0 0
        %438 = vmatpush1.bf16.msra.mxu0 0
        %439 = vmatprep.subr.bf16.mxu0 0
        %440 = vmatpush1.bf16.msra.mxu0 0
        %441 = vmatprep.subr.bf16.mxu0 0
        %442 = vmatpush1.bf16.msra.mxu0 0
        %443 = vmatprep.subr.bf16.mxu0 0
        %444 = vmatpush1.bf16.msra.mxu0 0
        %445 = vmatprep.subr.bf16.mxu0 0
        %446 = vmatpush1.bf16.msra.mxu0 0
        %447 = vmatprep.subr.bf16.mxu0 0
        %448 = vmatpush1.bf16.msra.mxu0 0
        %449 = vmatprep.subr.bf16.mxu0 0
        %450 = vmatpush1.bf16.msra.mxu0 0
        %451 = vmatprep.subr.bf16.mxu0 0
        %452 = vmatpush1.bf16.msra.mxu0 0
        %453 = vmatprep.mubr.bf16.mxu0 0
        %454 = vmatmul.mubr.bf16.gmra.mrb[0].mxu0 %v348
        %v455 = vpop.f32.mrb[0].mxu0
        %v456 = vadd.f32 %v371, %v455
        %v457 = vpop.f32.mrb[0].mxu0
        %v458 = vpop.f32.mrb[0].mxu0
        %v459 = vadd.f32 %v371, %v458
        %v460 = vpop.f32.mrb[0].mxu0
        %461 = vmatprep.mubr.bf16.mxu0 0
        %462 = vmatmul.mubr.bf16.gmra.mrb[0].mxu0 %v349
        %v463 = vpop.f32.mrb[0].mxu0
        %v464 = vadd.f32 %v371, %v463
        %v465 = vpop.f32.mrb[0].mxu0
        %v466 = vpop.f32.mrb[0].mxu0
        %v467 = vadd.f32 %v371, %v466
        %v468 = vpop.f32.mrb[0].mxu0
        %469 = vdwg.mxu0
        %v470 = vmax.f32 %v456, 0.0
        %v471 = vmax.f32 %v459, 0.0
        %v472 = vmax.f32 %v464, 0.0
        %v473 = vmax.f32 %v467, 0.0
        %v474 = vpack.c.bf16 %v471, %v470
        %v475 = vpack.c.bf16 %v473, %v472
        %v476 = vld [vmem:[#allocation7] sm:$0xf]
        %v477 = vld [vmem:[#allocation7 + $0x4] sm:$0xf]
        %v478 = vld [vmem:[#allocation7 + $0x8] sm:$0xf]
        %v479 = vld [vmem:[#allocation7 + $0xc] sm:$0xf]
        %v480 = vld [vmem:[#allocation7 + $0x10] sm:$0xf]
        %v481 = vld [vmem:[#allocation7 + $0x14] sm:$0xf]
        %v482 = vld [vmem:[#allocation7 + $0x18] sm:$0xf]
        %v483 = vld [vmem:[#allocation7 + $0x1c] sm:$0xf]
        %v484 = vld [vmem:[#allocation7 + $0x20] sm:$0xf]
        %v485 = vld [vmem:[#allocation7 + $0x24] sm:$0xf]
        %v486 = vld [vmem:[#allocation7 + $0x28] sm:$0xf]
        %v487 = vld [vmem:[#allocation7 + $0x2c] sm:$0xf]
        %v488 = vld [vmem:[#allocation7 + $0x30] sm:$0xf]
        %v489 = vld [vmem:[#allocation7 + $0x34] sm:$0xf]
        %v490 = vld [vmem:[#allocation7 + $0x38] sm:$0xf]
        %v491 = vld [vmem:[#allocation7 + $0x3c] sm:$0xf]
        %v492 = vld [vmem:[%s4] sm:$0x1]
        %v494 = vlaneseq
        %v495 = vshrl.u32 %v494, 7
        %v496 = vsub.s32 0, %v495
        %v497 = vrot.slane %v492, %v496
        %v515 = vunpack.c.l.b16 %v476
        %v516 = vunpack.c.l.b16 %v477
        %v517 = vunpack.c.l.b16 %v478
        %v518 = vunpack.c.l.b16 %v479
        %v519 = vunpack.c.l.b16 %v480
        %v520 = vunpack.c.l.b16 %v481
        %v521 = vunpack.c.l.b16 %v482
        %v522 = vunpack.c.l.b16 %v483
        %v523 = vunpack.c.l.b16 %v484
        %v524 = vunpack.c.l.b16 %v485
        %v525 = vunpack.c.l.b16 %v486
        %v526 = vunpack.c.l.b16 %v487
        %v527 = vunpack.c.l.b16 %v488
        %v528 = vunpack.c.l.b16 %v489
        %v529 = vunpack.c.l.b16 %v490
        %v530 = vunpack.c.l.b16 %v491
        %v531 = vpack.c.b16 %v516, %v515
        %v532 = vpack.c.b16 %v518, %v517
        %v533 = vpack.c.b16 %v520, %v519
        %v534 = vpack.c.b16 %v522, %v521
        %v535 = vpack.c.b16 %v524, %v523
        %v536 = vpack.c.b16 %v526, %v525
        %v537 = vpack.c.b16 %v528, %v527
        %v538 = vpack.c.b16 %v530, %v529
        %547 = vmatprep.subr.bf16.mxu0 0
        %548 = vmatpush1.bf16.msra.mxu0 %v531
        %549 = vmatprep.subr.bf16.mxu0 0
        %550 = vmatpush1.bf16.msra.mxu0 %v532
        %551 = vmatprep.subr.bf16.mxu0 0
        %552 = vmatpush1.bf16.msra.mxu0 %v533
        %553 = vmatprep.subr.bf16.mxu0 0
        %554 = vmatpush1.bf16.msra.mxu0 %v534
        %555 = vmatprep.subr.bf16.mxu0 0
        %556 = vmatpush1.bf16.msra.mxu0 %v535
        %557 = vmatprep.subr.bf16.mxu0 0
        %558 = vmatpush1.bf16.msra.mxu0 %v536
        %559 = vmatprep.subr.bf16.mxu0 0
        %560 = vmatpush1.bf16.msra.mxu0 %v537
        %561 = vmatprep.subr.bf16.mxu0 0
        %562 = vmatpush1.bf16.msra.mxu0 %v538
        %563 = vmatprep.subr.bf16.mxu0 0
        %564 = vmatpush1.bf16.msra.mxu0 0
        %565 = vmatprep.subr.bf16.mxu0 0
        %566 = vmatpush1.bf16.msra.mxu0 0
        %567 = vmatprep.subr.bf16.mxu0 0
        %568 = vmatpush1.bf16.msra.mxu0 0
        %569 = vmatprep.subr.bf16.mxu0 0
        %570 = vmatpush1.bf16.msra.mxu0 0
        %571 = vmatprep.subr.bf16.mxu0 0
        %572 = vmatpush1.bf16.msra.mxu0 0
        %573 = vmatprep.subr.bf16.mxu0 0
        %574 = vmatpush1.bf16.msra.mxu0 0
        %575 = vmatprep.subr.bf16.mxu0 0
        %576 = vmatpush1.bf16.msra.mxu0 0
        %577 = vmatprep.subr.bf16.mxu0 0
        %578 = vmatpush1.bf16.msra.mxu0 0
        %579 = vmatprep.mubr.bf16.mxu0 0
        %580 = vmatmul.mubr.bf16.gmra.mrb[0].mxu0 %v474
        %v581 = vpop.f32.mrb[0].mxu0
        %v582 = vadd.f32 %v497, %v581
        %v583 = vpop.f32.mrb[0].mxu0
        %v584 = vpop.f32.mrb[0].mxu0
        %v585 = vadd.f32 %v497, %v584
        %v586 = vpop.f32.mrb[0].mxu0
        %587 = vmatprep.mubr.bf16.mxu0 0
        %588 = vmatmul.mubr.bf16.gmra.mrb[0].mxu0 %v475
        %v589 = vpop.f32.mrb[0].mxu0
        %v590 = vadd.f32 %v497, %v589
        %v591 = vpop.f32.mrb[0].mxu0
        %v592 = vpop.f32.mrb[0].mxu0
        %v593 = vadd.f32 %v497, %v592
        %v594 = vpop.f32.mrb[0].mxu0
        %595 = vdwg.mxu0
        %v596 = vmax.f32 %v582, 0.0
        %v597 = vmax.f32 %v585, 0.0
        %v598 = vmax.f32 %v590, 0.0
        %v599 = vmax.f32 %v593, 0.0
        %v600 = vpack.c.bf16 %v597, %v596
        %v601 = vpack.c.bf16 %v599, %v598
        %s602 = scalar_lea.vmem [#allocation7], 64
        %v603 = vld [vmem:[%s602] sm:$0xf]
        %v604 = vld [vmem:[%s602 + $0x4] sm:$0xf]
        %v605 = vld [vmem:[%s602 + $0x8] sm:$0xf]
        %v606 = vld [vmem:[%s602 + $0xc] sm:$0xf]
        %v607 = vld [vmem:[%s602 + $0x10] sm:$0xf]
        %v608 = vld [vmem:[%s602 + $0x14] sm:$0xf]
        %v609 = vld [vmem:[%s602 + $0x18] sm:$0xf]
        %v610 = vld [vmem:[%s602 + $0x1c] sm:$0xf]
        %v611 = vld [vmem:[%s602 + $0x20] sm:$0xf]
        %v612 = vld [vmem:[%s602 + $0x24] sm:$0xf]
        %v613 = vld [vmem:[%s602 + $0x28] sm:$0xf]
        %v614 = vld [vmem:[%s602 + $0x2c] sm:$0xf]
        %v615 = vld [vmem:[%s602 + $0x30] sm:$0xf]
        %v616 = vld [vmem:[%s602 + $0x34] sm:$0xf]
        %v617 = vld [vmem:[%s602 + $0x38] sm:$0xf]
        %v618 = vld [vmem:[%s602 + $0x3c] sm:$0xf]
        %s619 = scalar_lea.vmem %s4, 1
        %v620 = vld [vmem:[%s619] sm:$0x1]
        %v622 = vlaneseq
        %v623 = vshrl.u32 %v622, 7
        %v624 = vsub.s32 0, %v623
        %v625 = vrot.slane %v620, %v624
        %v643 = vunpack.c.l.b16 %v603
        %v644 = vunpack.c.l.b16 %v604
        %v645 = vunpack.c.l.b16 %v605
        %v646 = vunpack.c.l.b16 %v606
        %v647 = vunpack.c.l.b16 %v607
        %v648 = vunpack.c.l.b16 %v608
        %v649 = vunpack.c.l.b16 %v609
        %v650 = vunpack.c.l.b16 %v610
        %v651 = vunpack.c.l.b16 %v611
        %v652 = vunpack.c.l.b16 %v612
        %v653 = vunpack.c.l.b16 %v613
        %v654 = vunpack.c.l.b16 %v614
        %v655 = vunpack.c.l.b16 %v615
        %v656 = vunpack.c.l.b16 %v616
        %v657 = vunpack.c.l.b16 %v617
        %v658 = vunpack.c.l.b16 %v618
        %v659 = vpack.c.b16 %v644, %v643
        %v660 = vpack.c.b16 %v646, %v645
        %v661 = vpack.c.b16 %v648, %v647
        %v662 = vpack.c.b16 %v650, %v649
        %v663 = vpack.c.b16 %v652, %v651
        %v664 = vpack.c.b16 %v654, %v653
        %v665 = vpack.c.b16 %v656, %v655
        %v666 = vpack.c.b16 %v658, %v657
        %675 = vmatprep.subr.bf16.mxu0 0
        %676 = vmatpush1.bf16.msra.mxu0 %v659
        %677 = vmatprep.subr.bf16.mxu0 0
        %678 = vmatpush1.bf16.msra.mxu0 %v660
        %679 = vmatprep.subr.bf16.mxu0 0
        %680 = vmatpush1.bf16.msra.mxu0 %v661
        %681 = vmatprep.subr.bf16.mxu0 0
        %682 = vmatpush1.bf16.msra.mxu0 %v662
        %683 = vmatprep.subr.bf16.mxu0 0
        %684 = vmatpush1.bf16.msra.mxu0 %v663
        %685 = vmatprep.subr.bf16.mxu0 0
        %686 = vmatpush1.bf16.msra.mxu0 %v664
        %687 = vmatprep.subr.bf16.mxu0 0
        %688 = vmatpush1.bf16.msra.mxu0 %v665
        %689 = vmatprep.subr.bf16.mxu0 0
        %690 = vmatpush1.bf16.msra.mxu0 %v666
        %691 = vmatprep.subr.bf16.mxu0 0
        %692 = vmatpush1.bf16.msra.mxu0 0
        %693 = vmatprep.subr.bf16.mxu0 0
        %694 = vmatpush1.bf16.msra.mxu0 0
        %695 = vmatprep.subr.bf16.mxu0 0
        %696 = vmatpush1.bf16.msra.mxu0 0
        %697 = vmatprep.subr.bf16.mxu0 0
        %698 = vmatpush1.bf16.msra.mxu0 0
        %699 = vmatprep.subr.bf16.mxu0 0
        %700 = vmatpush1.bf16.msra.mxu0 0
        %701 = vmatprep.subr.bf16.mxu0 0
        %702 = vmatpush1.bf16.msra.mxu0 0
        %703 = vmatprep.subr.bf16.mxu0 0
        %704 = vmatpush1.bf16.msra.mxu0 0
        %705 = vmatprep.subr.bf16.mxu0 0
        %706 = vmatpush1.bf16.msra.mxu0 0
        %707 = vmatprep.mubr.bf16.mxu0 0
        %708 = vmatmul.mubr.bf16.gmra.mrb[0].mxu0 %v600
        %v709 = vpop.f32.mrb[0].mxu0
        %v710 = vadd.f32 %v625, %v709
        %v711 = vpop.f32.mrb[0].mxu0
        %v712 = vpop.f32.mrb[0].mxu0
        %v713 = vadd.f32 %v625, %v712
        %v714 = vpop.f32.mrb[0].mxu0
        %715 = vmatprep.mubr.bf16.mxu0 0
        %716 = vmatmul.mubr.bf16.gmra.mrb[0].mxu0 %v601
        %v717 = vpop.f32.mrb[0].mxu0
        %v718 = vadd.f32 %v625, %v717
        %v719 = vpop.f32.mrb[0].mxu0
        %v720 = vpop.f32.mrb[0].mxu0
        %v721 = vadd.f32 %v625, %v720
        %v722 = vpop.f32.mrb[0].mxu0
        %723 = vdwg.mxu0
        %v724 = vmax.f32 %v710, 0.0
        %v725 = vmax.f32 %v713, 0.0
        %v726 = vmax.f32 %v718, 0.0
        %v727 = vmax.f32 %v721, 0.0
        %v728 = vpack.c.bf16 %v725, %v724
        %v729 = vpack.c.bf16 %v727, %v726
        %v730 = vld [vmem:[#allocation8] sm:$0xf]
        %v731 = vld [vmem:[#allocation8 + $0x4] sm:$0xf]
        %v732 = vld [vmem:[#allocation8 + $0x8] sm:$0xf]
        %v733 = vld [vmem:[#allocation8 + $0xc] sm:$0xf]
        %v734 = vld [vmem:[#allocation8 + $0x10] sm:$0xf]
        %v735 = vld [vmem:[#allocation8 + $0x14] sm:$0xf]
        %v736 = vld [vmem:[#allocation8 + $0x18] sm:$0xf]
        %v737 = vld [vmem:[#allocation8 + $0x1c] sm:$0xf]
        %v738 = vld [vmem:[#allocation8 + $0x20] sm:$0xf]
        %v739 = vld [vmem:[#allocation8 + $0x24] sm:$0xf]
        %v740 = vld [vmem:[#allocation8 + $0x28] sm:$0xf]
        %v741 = vld [vmem:[#allocation8 + $0x2c] sm:$0xf]
        %v742 = vld [vmem:[#allocation8 + $0x30] sm:$0xf]
        %v743 = vld [vmem:[#allocation8 + $0x34] sm:$0xf]
        %v744 = vld [vmem:[#allocation8 + $0x38] sm:$0xf]
        %v745 = vld [vmem:[#allocation8 + $0x3c] sm:$0xf]
        %v746 = vld [vmem:[%s6] sm:$0x1]
        %v748 = vlaneseq
        %v749 = vshrl.u32 %v748, 7
        %v750 = vsub.s32 0, %v749
        %v751 = vrot.slane %v746, %v750
        %v769 = vunpack.c.l.b16 %v730
        %v770 = vunpack.c.l.b16 %v731
        %v771 = vunpack.c.l.b16 %v732
        %v772 = vunpack.c.l.b16 %v733
        %v773 = vunpack.c.l.b16 %v734
        %v774 = vunpack.c.l.b16 %v735
        %v775 = vunpack.c.l.b16 %v736
        %v776 = vunpack.c.l.b16 %v737
        %v777 = vunpack.c.l.b16 %v738
        %v778 = vunpack.c.l.b16 %v739
        %v779 = vunpack.c.l.b16 %v740
        %v780 = vunpack.c.l.b16 %v741
        %v781 = vunpack.c.l.b16 %v742
        %v782 = vunpack.c.l.b16 %v743
        %v783 = vunpack.c.l.b16 %v744
        %v784 = vunpack.c.l.b16 %v745
        %v785 = vpack.c.b16 %v770, %v769
        %v786 = vpack.c.b16 %v772, %v771
        %v787 = vpack.c.b16 %v774, %v773
        %v788 = vpack.c.b16 %v776, %v775
        %v789 = vpack.c.b16 %v778, %v777
        %v790 = vpack.c.b16 %v780, %v779
        %v791 = vpack.c.b16 %v782, %v781
        %v792 = vpack.c.b16 %v784, %v783
        %801 = vmatprep.subr.bf16.mxu0 0
        %802 = vmatpush1.bf16.msra.mxu0 %v785
        %803 = vmatprep.subr.bf16.mxu0 0
        %804 = vmatpush1.bf16.msra.mxu0 %v786
        %805 = vmatprep.subr.bf16.mxu0 0
        %806 = vmatpush1.bf16.msra.mxu0 %v787
        %807 = vmatprep.subr.bf16.mxu0 0
        %808 = vmatpush1.bf16.msra.mxu0 %v788
        %809 = vmatprep.subr.bf16.mxu0 0
        %810 = vmatpush1.bf16.msra.mxu0 %v789
        %811 = vmatprep.subr.bf16.mxu0 0
        %812 = vmatpush1.bf16.msra.mxu0 %v790
        %813 = vmatprep.subr.bf16.mxu0 0
        %814 = vmatpush1.bf16.msra.mxu0 %v791
        %815 = vmatprep.subr.bf16.mxu0 0
        %816 = vmatpush1.bf16.msra.mxu0 %v792
        %817 = vmatprep.subr.bf16.mxu0 0
        %818 = vmatpush1.bf16.msra.mxu0 0
        %819 = vmatprep.subr.bf16.mxu0 0
        %820 = vmatpush1.bf16.msra.mxu0 0
        %821 = vmatprep.subr.bf16.mxu0 0
        %822 = vmatpush1.bf16.msra.mxu0 0
        %823 = vmatprep.subr.bf16.mxu0 0
        %824 = vmatpush1.bf16.msra.mxu0 0
        %825 = vmatprep.subr.bf16.mxu0 0
        %826 = vmatpush1.bf16.msra.mxu0 0
        %827 = vmatprep.subr.bf16.mxu0 0
        %828 = vmatpush1.bf16.msra.mxu0 0
        %829 = vmatprep.subr.bf16.mxu0 0
        %830 = vmatpush1.bf16.msra.mxu0 0
        %831 = vmatprep.subr.bf16.mxu0 0
        %832 = vmatpush1.bf16.msra.mxu0 0
        %833 = vmatprep.mubr.bf16.mxu0 0
        %834 = vmatmul.mubr.bf16.gmra.mrb[0].mxu0 %v728
        %v835 = vpop.f32.mrb[0].mxu0
        %v836 = vadd.f32 %v751, %v835
        %v837 = vpop.f32.mrb[0].mxu0
        %v838 = vpop.f32.mrb[0].mxu0
        %v839 = vadd.f32 %v751, %v838
        %v840 = vpop.f32.mrb[0].mxu0
        %841 = vmatprep.mubr.bf16.mxu0 0
        %842 = vmatmul.mubr.bf16.gmra.mrb[0].mxu0 %v729
        %v843 = vpop.f32.mrb[0].mxu0
        %v844 = vadd.f32 %v751, %v843
        %v845 = vpop.f32.mrb[0].mxu0
        %v846 = vpop.f32.mrb[0].mxu0
        %v847 = vadd.f32 %v751, %v846
        %v848 = vpop.f32.mrb[0].mxu0
        %849 = vdwg.mxu0
        %v850 = vmax.f32 %v836, 0.0
        %v851 = vmax.f32 %v839, 0.0
        %v852 = vmax.f32 %v844, 0.0
        %v853 = vmax.f32 %v847, 0.0
        %v854 = vadd.f32 %v850, %v344
        %v855 = vadd.f32 %v851, %v345
        %v856 = vadd.f32 %v852, %v346
        %v857 = vadd.f32 %v853, %v347
        %v858 = vsub.f32 0.0, %v854
        %v859 = vsub.f32 0.0, %v855
        %v860 = vsub.f32 0.0, %v856
        %v861 = vsub.f32 0.0, %v857
        %v862 = vmin.f32 %v858, 80.0
        %v863 = vmin.f32 %v859, 80.0
        %v864 = vmin.f32 %v860, 80.0
        %v865 = vmin.f32 %v861, 80.0
        %v866 = vmul.f32 %v862, 1.442695
        %v867 = vpow.pop %v866
        %v868 = vmul.f32 %v863, 1.442695
        %v869 = vpow.pop %v868
        %v870 = vmul.f32 %v864, 1.442695
        %v871 = vpow.pop %v870
        %v872 = vmul.f32 %v865, 1.442695
        %v873 = vpow.pop %v872
        %v874 = vadd.f32 %v867, 1.0
        %v875 = vadd.f32 %v869, 1.0
        %v876 = vadd.f32 %v871, 1.0
        %v877 = vadd.f32 %v873, 1.0
        %v878 = vrcp.pop %v874
        %v879 = vrcp.pop %v875
        %v880 = vrcp.pop %v876
        %v881 = vrcp.pop %v877
        %882 = vst [vmem:[%s340] sm:$0xff] %v878
        %883 = vst [vmem:[%s340 + $0x8] sm:$0xff] %v879
        %884 = vst [vmem:[%s340 + $0x10] sm:$0xff] %v880
        %885 = vst [vmem:[%s340 + $0x18] sm:$0xff] %v881
        %s886 = sand.u32 %s186, 1
        %s887 = scalar_lea.sflag [#allocation4], %s886
        %s888 = sand.u32 %s186, 1
        %s889 = smul.addr %s888, 32
        %s890 = scalar_lea.vmem [#allocation10], %s889
        // Predicated region
        $region65: #{tpu_custom_call.1} parent=47 // pred_check
          %p891 = pneg %p196
        $region66: #{tpu_custom_call.1} parent=47 // pred_check_branch
          %893 = sbr.rel (%p891) target = $region68
        $region67: #{tpu_custom_call.1} parent=47 // pred_region
          %s894 = smul.u32 4, %s26
          %s896 = ssub.s32 512, 512
          %897 = vsyncadd %s887, %s896
          %s898 = smul.addr %s894, 128
          %s899 = scalar_lea.hbm %s7, %s898
          %s900 = sshll.u32 %s890, 4
          %s901 = int_to_ptr.vmem [resolvable:$true] %s900
          %906 = dma.vmem_to_hbm [thread:$0]  %s901, 512, %s899, %s887, 128, 128, 8
        $region68: #{tpu_custom_call.1} parent=47 // pred_fallthru
          _
      $region48: #{tpu_custom_call.1} parent=5 // pred_fallthru
        _
      %p907 = scmp.le.s32.totalorder 2, %s21
      // Predicated region
      $region69: #{tpu_custom_call.1} parent=5 // pred_check
        %p908 = pneg %p907
      $region70: #{tpu_custom_call.1} parent=5 // pred_check_branch
        %910 = sbr.rel (%p908) target = $region72
      $region71: #{tpu_custom_call.1} parent=5 // pred_region
        %s911 = ssub.s32 %s21, 2
        // Predicated region
        $region73: #{tpu_custom_call.1} parent=71 // pred_check
          %p912 = pneg %p202
        $region74: #{tpu_custom_call.1} parent=71 // pred_check_branch
          %914 = sbr.rel (%p912) target = $region76
        $region75: #{tpu_custom_call.1} parent=71 // pred_region
          %s915 = sand.u32 %s187, 1
          %s916 = scalar_lea.sflag [#allocation4], %s915
          %s917 = sand.u32 %s187, 1
          %s918 = smul.addr %s917, 32
          %s919 = scalar_lea.vmem [#allocation10], %s918
          %920 = dma.done %s916, 512
        $region76: #{tpu_custom_call.1} parent=71 // pred_fallthru
          _
      $region72: #{tpu_custom_call.1} parent=5 // pred_fallthru
        _
    $region6: #{tpu_custom_call.1} parent=1 // loop_footer
      %s25 = sadd.s32 1, %s21
    $region7: #{tpu_custom_call.1} parent=1 // loop_footer_branch
      %20 = sbr.rel target = $region3
    $region8: #{tpu_custom_call.1} parent=1 // loop_exit
      _
    %921 = vsyncpa [#allocation3], 1
    %s922 = scalar_lea.sflag [#allocation3], 1
    %923 = vsyncpa %s922, 1
    %924 = vsyncpa [#allocation6], 1
    %925 = vsyncpa [#allocation9], 1
    %926 = vsyncpa [#allocation4], 1
    %s927 = scalar_lea.sflag [#allocation4], 1
    %928 = vsyncpa %s927, 1

// kernel: tpu_custom_call.1
$region0: #{tpu_custom_call.1}
  #allocation0 [shape = 'u32[]', space=smem, size = 0x4, offset = 0x4, fixed_abs, tag = 'smem constant byte address 0x4 - core index']
  #allocation1 [shape = 'u32[144,128]{1,0:T(1,128)}', space=vmem, size = 0x12000, scoped, tag = 'internal scratch']
  %s0 = inlined_call_operand.hbm [shape: f32[256,128], index: 0, kind: input, shape index: {}]
  %s1 = inlined_call_operand.hbm [shape: bf16[128,128], index: 1, kind: input, shape index: {}]
  %s2 = inlined_call_operand.vmem [shape: f32[1,128], index: 2, kind: input, shape index: {}]
  %s3 = inlined_call_operand.hbm [shape: bf16[2,128,128], index: 3, kind: input, shape index: {}]
  %s4 = inlined_call_operand.vmem [shape: f32[2,1,128], index: 4, kind: input, shape index: {}]
  %s5 = inlined_call_operand.hbm [shape: bf16[128,128], index: 5, kind: input, shape index: {}]
  %s6 = inlined_call_operand.vmem [shape: f32[1,128], index: 6, kind: input, shape index: {}]
  %s7 = inlined_call_operand.hbm [shape: f32[256,128], index: 7, kind: output, shape index: {}]
  %s8 = sld [smem:[#allocation0]]
  $region77: #{tpu_custom_call.1} parent=0
    _
  %s10 = ssub.s32 1, %s8
  %s11 = scalar_select 0, %s10, %s8
  $region1: #{tpu_custom_call.1} parent=0
    #allocation2 [shape = 'u8[32768]{0}', space=vmem, size = 0x8000, scoped, tag = 'input window, operand 0']
    #allocation3 [shape = 's32[2]{0}', space=sflag, size = 0x8, scoped, tag = 'scoped memory for tpu_custom_call.1']
    #allocation4 [shape = 's32[2]{0}', space=sflag, size = 0x8, scoped, tag = 'scoped memory for tpu_custom_call.1']
    #allocation5 [shape = 'u8[32768]{0}', space=vmem, size = 0x8000, scoped, tag = 'input window, operand 1, single buffered']
    #allocation6 [shape = 's32[1]{0}', space=sflag, size = 0x4, scoped, tag = 'scoped memory for tpu_custom_call.1']
    #allocation7 [shape = 'u8[65536]{0}', space=vmem, size = 0x10000, scoped, tag = 'input window, operand 3, single buffered']
    #allocation8 [shape = 'u8[32768]{0}', space=vmem, size = 0x8000, scoped, tag = 'input window, operand 5, single buffered']
    #allocation9 [shape = 's32[1]{0}', space=sflag, size = 0x4, scoped, tag = 'scoped memory for tpu_custom_call.1']
    #allocation10 [shape = 'u8[32768]{0}', space=vmem, size = 0x8000, scoped, tag = 'output window, operand 0']
    %12 = vsyncpa [#allocation3], 0
    %s13 = scalar_lea.sflag [#allocation3], 1
    %14 = vsyncpa %s13, 0
    %15 = vsyncpa [#allocation6], 0
    %16 = vsyncpa [#allocation9], 0
    %17 = vsyncpa [#allocation4], 0
    %s18 = scalar_lea.sflag [#allocation4], 1
    %19 = vsyncpa %s18, 0
    loop: start=0, step=1, limit=10
    $region2: #{tpu_custom_call.1} parent=1 // loop_pre_header
      _
    $region3: #{tpu_custom_call.1} parent=1 // loop_header
      %s21 = sphi 0, %s25
      %p22 = scmp.ge.s32.totalorder %s21, 10
      %s31 = sphi 0, %s33
      %s34 = sphi 0, %s31
      %s35 = sphi 0, %s34
      %s51 = sphi 0, %s35
      %s55 = sphi 0, %s55
      %s57 = sphi 0, %s55
      %s58 = sphi 0, %s57
      %s72 = sphi 0, %s58
      %s76 = sphi 0, %s76
      %s78 = sphi 0, %s76
      %s79 = sphi 0, %s78
      %s93 = sphi 0, %s79
      %s97 = sphi 0, %s97
      %s99 = sphi 0, %s97
      %s100 = sphi 0, %s99
      %s114 = sphi 0, %s100
      %s118 = sphi 0, %s118
      %s120 = sphi 0, %s118
      %s121 = sphi 0, %s120
      %s135 = sphi 0, %s121
      %s139 = sphi 0, %s139
      %s141 = sphi 0, %s139
      %s142 = sphi 0, %s141
      %s156 = sphi 0, %s142
      %s160 = sphi 0, %s160
      %s162 = sphi 0, %s160
      %s163 = sphi 0, %s162
      %s177 = sphi 0, %s163
      %s183 = sphi 0, %s185
      %s186 = sphi 0, %s183
      %s187 = sphi 0, %s186
      %s203 = sphi 0, %s187
    $region4: #{tpu_custom_call.1} parent=1 // loop_header_branch
      %24 = sbr.rel (%p22) target = $region8
    $region5: #{tpu_custom_call.1} parent=1 // loop_body
      %s26 = ssub.s32 %s21, 1
      %s27 = ssub.s32 %s21, 2
      %s28 = sadd.s32 %s21, 1
      %s29 = ssub.s32 %s21, %s28
      %p30 = scmp.eq.s32.totalorder %s29, 0
      %s32 = sadd.s32 %s31, 1
      %s33 = scalar_select %p30, %s31, %s32
      %p36 = pneg %p30
      %p37 = scmp.eq.s32.totalorder %s21, 7
      %p38 = por %p36, %p37
      %p39 = scmp.ne.s32.totalorder %s31, %s34
      %p40 = scmp.eq.s32.totalorder %s21, 0
      %p41 = por %p39, %p40
      %p42 = scmp.ne.s32.totalorder %s31, %s34
      %p43 = scmp.eq.s32.totalorder %s26, 7
      %p44 = por %p42, %p43
      %p45 = scmp.ne.s32.totalorder %s34, %s35
      %p46 = scmp.eq.s32.totalorder %s26, 0
      %p47 = por %p45, %p46
      %p48 = scmp.ne.s32.totalorder %s34, %s35
      %p49 = scmp.eq.s32.totalorder %s27, 7
      %p50 = por %p48, %p49
      %p52 = scmp.ne.s32.totalorder %s35, %s51
      %p53 = scmp.eq.s32.totalorder %s27, 0
      %p54 = por %p52, %p53
      %s56 = sadd.s32 %s55, 1
      %p59 = scmp.eq.s32.totalorder %s21, 7
      %p60 = scmp.ne.s32.totalorder %s55, %s57
      %p61 = scmp.eq.s32.totalorder %s21, 0
      %p62 = por %p60, %p61
      %p63 = scmp.ne.s32.totalorder %s55, %s57
      %p64 = scmp.eq.s32.totalorder %s26, 7
      %p65 = por %p63, %p64
      %p66 = scmp.ne.s32.totalorder %s57, %s58
      %p67 = scmp.eq.s32.totalorder %s26, 0
      %p68 = por %p66, %p67
      %p69 = scmp.ne.s32.totalorder %s57, %s58
      %p70 = scmp.eq.s32.totalorder %s27, 7
      %p71 = por %p69, %p70
      %p73 = scmp.ne.s32.totalorder %s58, %s72
      %p74 = scmp.eq.s32.totalorder %s27, 0
      %p75 = por %p73, %p74
      %s77 = sadd.s32 %s76, 1
      %p80 = scmp.eq.s32.totalorder %s21, 7
      %p81 = scmp.ne.s32.totalorder %s76, %s78
      %p82 = scmp.eq.s32.totalorder %s21, 0
      %p83 = por %p81, %p82
      %p84 = scmp.ne.s32.totalorder %s76, %s78
      %p85 = scmp.eq.s32.totalorder %s26, 7
      %p86 = por %p84, %p85
      %p87 = scmp.ne.s32.totalorder %s78, %s79
      %p88 = scmp.eq.s32.totalorder %s26, 0
      %p89 = por %p87, %p88
      %p90 = scmp.ne.s32.totalorder %s78, %s79
      %p91 = scmp.eq.s32.totalorder %s27, 7
      %p92 = por %p90, %p91
      %p94 = scmp.ne.s32.totalorder %s79, %s93
      %p95 = scmp.eq.s32.totalorder %s27, 0
      %p96 = por %p94, %p95
      %s98 = sadd.s32 %s97, 1
      %p101 = scmp.eq.s32.totalorder %s21, 7
      %p102 = scmp.ne.s32.totalorder %s97, %s99
      %p103 = scmp.eq.s32.totalorder %s21, 0
      %p104 = por %p102, %p103
      %p105 = scmp.ne.s32.totalorder %s97, %s99
      %p106 = scmp.eq.s32.totalorder %s26, 7
      %p107 = por %p105, %p106
      %p108 = scmp.ne.s32.totalorder %s99, %s100
      %p109 = scmp.eq.s32.totalorder %s26, 0
      %p110 = por %p108, %p109
      %p111 = scmp.ne.s32.totalorder %s99, %s100
      %p112 = scmp.eq.s32.totalorder %s27, 7
      %p113 = por %p111, %p112
      %p115 = scmp.ne.s32.totalorder %s100, %s114
      %p116 = scmp.eq.s32.totalorder %s27, 0
      %p117 = por %p115, %p116
      %s119 = sadd.s32 %s118, 1
      %p122 = scmp.eq.s32.totalorder %s21, 7
      %p123 = scmp.ne.s32.totalorder %s118, %s120
      %p124 = scmp.eq.s32.totalorder %s21, 0
      %p125 = por %p123, %p124
      %p126 = scmp.ne.s32.totalorder %s118, %s120
      %p127 = scmp.eq.s32.totalorder %s26, 7
      %p128 = por %p126, %p127
      %p129 = scmp.ne.s32.totalorder %s120, %s121
      %p130 = scmp.eq.s32.totalorder %s26, 0
      %p131 = por %p129, %p130
      %p132 = scmp.ne.s32.totalorder %s120, %s121
      %p133 = scmp.eq.s32.totalorder %s27, 7
      %p134 = por %p132, %p133
      %p136 = scmp.ne.s32.totalorder %s121, %s135
      %p137 = scmp.eq.s32.totalorder %s27, 0
      %p138 = por %p136, %p137
      %s140 = sadd.s32 %s139, 1
      %p143 = scmp.eq.s32.totalorder %s21, 7
      %p144 = scmp.ne.s32.totalorder %s139, %s141
      %p145 = scmp.eq.s32.totalorder %s21, 0
      %p146 = por %p144, %p145
      %p147 = scmp.ne.s32.totalorder %s139, %s141
      %p148 = scmp.eq.s32.totalorder %s26, 7
      %p149 = por %p147, %p148
      %p150 = scmp.ne.s32.totalorder %s141, %s142
      %p151 = scmp.eq.s32.totalorder %s26, 0
      %p152 = por %p150, %p151
      %p153 = scmp.ne.s32.totalorder %s141, %s142
      %p154 = scmp.eq.s32.totalorder %s27, 7
      %p155 = por %p153, %p154
      %p157 = scmp.ne.s32.totalorder %s142, %s156
      %p158 = scmp.eq.s32.totalorder %s27, 0
      %p159 = por %p157, %p158
      %s161 = sadd.s32 %s160, 1
      %p164 = scmp.eq.s32.totalorder %s21, 7
      %p165 = scmp.ne.s32.totalorder %s160, %s162
      %p166 = scmp.eq.s32.totalorder %s21, 0
      %p167 = por %p165, %p166
      %p168 = scmp.ne.s32.totalorder %s160, %s162
      %p169 = scmp.eq.s32.totalorder %s26, 7
      %p170 = por %p168, %p169
      %p171 = scmp.ne.s32.totalorder %s162, %s163
      %p172 = scmp.eq.s32.totalorder %s26, 0
      %p173 = por %p171, %p172
      %p174 = scmp.ne.s32.totalorder %s162, %s163
      %p175 = scmp.eq.s32.totalorder %s27, 7
      %p176 = por %p174, %p175
      %p178 = scmp.ne.s32.totalorder %s163, %s177
      %p179 = scmp.eq.s32.totalorder %s27, 0
      %p180 = por %p178, %p179
      %s181 = ssub.s32 %s21, %s28
      %p182 = scmp.eq.s32.totalorder %s181, 0
      %s184 = sadd.s32 %s183, 1
      %s185 = scalar_select %p182, %s183, %s184
      %p188 = pneg %p182
      %p189 = scmp.eq.s32.totalorder %s21, 7
      %p190 = por %p188, %p189
      %p191 = scmp.ne.s32.totalorder %s183, %s186
      %p192 = scmp.eq.s32.totalorder %s21, 0
      %p193 = por %p191, %p192
      %p194 = scmp.ne.s32.totalorder %s183, %s186
      %p195 = scmp.eq.s32.totalorder %s26, 7
      %p196 = por %p194, %p195
      %p197 = scmp.ne.s32.totalorder %s186, %s187
      %p198 = scmp.eq.s32.totalorder %s26, 0
      %p199 = por %p197, %p198
      %p200 = scmp.ne.s32.totalorder %s186, %s187
      %p201 = scmp.eq.s32.totalorder %s27, 7
      %p202 = por %p200, %p201
      %p204 = scmp.ne.s32.totalorder %s187, %s203
      %p205 = scmp.eq.s32.totalorder %s27, 0
      %p206 = por %p204, %p205
      %p207 = scmp.le.s32.totalorder 1, %s21
      %p208 = scmp.lt.s32.totalorder %s21, 9
      %p209 = pnand %p207, %p208
      %p210 = pneg %p209
      // Predicated region
      $region9: #{tpu_custom_call.1} parent=5 // pred_check
        _
      $region10: #{tpu_custom_call.1} parent=5 // pred_check_branch
        %212 = sbr.rel (%p209) target = $region12
      $region11: #{tpu_custom_call.1} parent=5 // pred_region
        %s213 = ssub.s32 %s21, 1
        // Predicated region
        $region13: #{tpu_custom_call.1} parent=11 // pred_check
          %p214 = pneg %p68
        $region14: #{tpu_custom_call.1} parent=11 // pred_check_branch
          %216 = sbr.rel (%p214) target = $region16
        $region15: #{tpu_custom_call.1} parent=11 // pred_region
          %s218 = ssub.s32 1024, 1024
          %219 = vsyncadd [#allocation6], %s218
          %s220 = sshll.u32 [#allocation5], 4
          %s221 = int_to_ptr.vmem [resolvable:$true] %s220
          %226 = dma.hbm_to_vmem [thread:$0]  %s1, 1024, %s221, [#allocation6], 64, 64, 4
        $region16: #{tpu_custom_call.1} parent=11 // pred_fallthru
          _
        // Predicated region
        $region17: #{tpu_custom_call.1} parent=11 // pred_check
          %p227 = pneg %p89
        $region18: #{tpu_custom_call.1} parent=11 // pred_check_branch
          %229 = sbr.rel (%p227) target = $region20
        $region19: #{tpu_custom_call.1} parent=11 // pred_region
          _
        $region20: #{tpu_custom_call.1} parent=11 // pred_fallthru
          _
        // Predicated region
        $region21: #{tpu_custom_call.1} parent=11 // pred_check
          %p230 = pneg %p110
        $region22: #{tpu_custom_call.1} parent=11 // pred_check_branch
          %232 = sbr.rel (%p230) target = $region24
        $region23: #{tpu_custom_call.1} parent=11 // pred_region
          %s234 = ssub.s32 2048, 2048
          %235 = vsyncadd [#allocation6], %s234
          %s236 = sshll.u32 [#allocation7], 4
          %s237 = int_to_ptr.vmem [resolvable:$true] %s236
          %242 = dma.hbm_to_vmem [thread:$0]  %s3, 2048, %s237, [#allocation6], 64, 64, 4
        $region24: #{tpu_custom_call.1} parent=11 // pred_fallthru
          _
        // Predicated region
        $region25: #{tpu_custom_call.1} parent=11 // pred_check
          %p243 = pneg %p131
        $region26: #{tpu_custom_call.1} parent=11 // pred_check_branch
          %245 = sbr.rel (%p243) target = $region28
        $region27: #{tpu_custom_call.1} parent=11 // pred_region
          _
        $region28: #{tpu_custom_call.1} parent=11 // pred_fallthru
          _
        // Predicated region
        $region29: #{tpu_custom_call.1} parent=11 // pred_check
          %p246 = pneg %p152
        $region30: #{tpu_custom_call.1} parent=11 // pred_check_branch
          %248 = sbr.rel (%p246) target = $region32
        $region31: #{tpu_custom_call.1} parent=11 // pred_region
          %s250 = ssub.s32 1024, 1024
          %251 = vsyncadd [#allocation9], %s250
          %s252 = sshll.u32 [#allocation8], 4
          %s253 = int_to_ptr.vmem [resolvable:$true] %s252
          %258 = dma.hbm_to_vmem [thread:$0]  %s5, 1024, %s253, [#allocation9], 64, 64, 4
        $region32: #{tpu_custom_call.1} parent=11 // pred_fallthru
          _
        // Predicated region
        $region33: #{tpu_custom_call.1} parent=11 // pred_check
          %p259 = pneg %p173
        $region34: #{tpu_custom_call.1} parent=11 // pred_check_branch
          %261 = sbr.rel (%p259) target = $region36
        $region35: #{tpu_custom_call.1} parent=11 // pred_region
          _
        $region36: #{tpu_custom_call.1} parent=11 // pred_fallthru
          _
      $region12: #{tpu_custom_call.1} parent=5 // pred_fallthru
        _
      %p262 = scmp.lt.s32.totalorder %s21, 8
      // Predicated region
      $region37: #{tpu_custom_call.1} parent=5 // pred_check
        %p263 = pneg %p262
      $region38: #{tpu_custom_call.1} parent=5 // pred_check_branch
        %265 = sbr.rel (%p263) target = $region40
      $region39: #{tpu_custom_call.1} parent=5 // pred_region
        // Predicated region
        $region41: #{tpu_custom_call.1} parent=39 // pred_check
          %p266 = pneg %p41
        $region42: #{tpu_custom_call.1} parent=39 // pred_check_branch
          %268 = sbr.rel (%p266) target = $region44
        $region43: #{tpu_custom_call.1} parent=39 // pred_region
          %s269 = sand.u32 %s31, 1
          %s270 = scalar_lea.sflag [#allocation3], %s269
          %s271 = sand.u32 %s31, 1
          %s272 = smul.addr %s271, 32
          %s273 = scalar_lea.vmem [#allocation2], %s272
          %s274 = smul.u32 4, %s21
          %s276 = ssub.s32 512, 512
          %277 = vsyncadd %s270, %s276
          %s278 = smul.addr %s274, 128
          %s279 = scalar_lea.hbm %s0, %s278
          %s280 = sshll.u32 %s273, 4
          %s281 = int_to_ptr.vmem [resolvable:$true] %s280
          %286 = dma.hbm_to_vmem [thread:$0]  %s279, 512, %s281, %s270, 128, 128, 8
        $region44: #{tpu_custom_call.1} parent=39 // pred_fallthru
          _
      $region40: #{tpu_custom_call.1} parent=5 // pred_fallthru
        _
      %p287 = scmp.le.s32.totalorder 1, %s21
      %p288 = scmp.lt.s32.totalorder %s21, 9
      %p289 = pnand %p287, %p288
      %p290 = pneg %p289
      // Predicated region
      $region45: #{tpu_custom_call.1} parent=5 // pred_check
        _
      $region46: #{tpu_custom_call.1} parent=5 // pred_check_branch
        %292 = sbr.rel (%p289) target = $region48
      $region47: #{tpu_custom_call.1} parent=5 // pred_region
        %s293 = ssub.s32 %s21, 1
        %s294 = sand.u32 %s34, 1
        %s295 = scalar_lea.sflag [#allocation3], %s294
        %s296 = sand.u32 %s34, 1
        %s297 = smul.addr %s296, 32
        %s298 = scalar_lea.vmem [#allocation2], %s297
        // Predicated region
        $region49: #{tpu_custom_call.1} parent=47 // pred_check
          %p299 = pneg %p47
        $region50: #{tpu_custom_call.1} parent=47 // pred_check_branch
          %301 = sbr.rel (%p299) target = $region52
        $region51: #{tpu_custom_call.1} parent=47 // pred_region
          %302 = dma.done %s295, 512
        $region52: #{tpu_custom_call.1} parent=47 // pred_fallthru
          _
        // Predicated region
        $region53: #{tpu_custom_call.1} parent=47 // pred_check
          %p303 = pneg %p68
        $region54: #{tpu_custom_call.1} parent=47 // pred_check_branch
          %305 = sbr.rel (%p303) target = $region56
        $region55: #{tpu_custom_call.1} parent=47 // pred_region
          %306 = dma.done [#allocation6], 1024
        $region56: #{tpu_custom_call.1} parent=47 // pred_fallthru
          _
        // Predicated region
        $region57: #{tpu_custom_call.1} parent=47 // pred_check
          %p307 = pneg %p110
        $region58: #{tpu_custom_call.1} parent=47 // pred_check_branch
          %309 = sbr.rel (%p307) target = $region60
        $region59: #{tpu_custom_call.1} parent=47 // pred_region
          %310 = dma.done [#allocation6], 2048
        $region60: #{tpu_custom_call.1} parent=47 // pred_fallthru
          _
        // Predicated region
        $region61: #{tpu_custom_call.1} parent=47 // pred_check
          %p311 = pneg %p152
        $region62: #{tpu_custom_call.1} parent=47 // pred_check_branch
          %313 = sbr.rel (%p311) target = $region64
        $region63: #{tpu_custom_call.1} parent=47 // pred_region
          %314 = dma.done [#allocation9], 1024
        $region64: #{tpu_custom_call.1} parent=47 // pred_fallthru
          _
        %s315 = sand.u32 %s34, 1
        %s316 = scalar_lea.sflag [#allocation3], %s315
        %s317 = sand.u32 %s34, 1
        %s318 = smul.addr %s317, 32
        %s319 = scalar_lea.vmem [#allocation2], %s318
        %p320 = pneg %p47
        %p321 = pneg %p44
        %p322 = pneg %p68
        %p323 = pneg %p65
        %p324 = pneg %p89
        %p325 = pneg %p86
        %p326 = pneg %p110
        %p327 = pneg %p107
        %p328 = pneg %p131
        %p329 = pneg %p128
        %p330 = pneg %p152
        %p331 = pneg %p149
        %p332 = pneg %p173
        %p333 = pneg %p170
        %p334 = pneg %p199
        %p335 = pneg %p196
        %s336 = sand.u32 %s186, 1
        %s337 = scalar_lea.sflag [#allocation4], %s336
        %s338 = sand.u32 %s186, 1
        %s339 = smul.addr %s338, 32
        %s340 = scalar_lea.vmem [#allocation10], %s339
        %s341 = smul.u32 4, %s26
        %s342 = smul.u32 4, %s26
        %v344 = vld [vmem:[%s298] sm:$0xff]
        %v345 = vld [vmem:[%s298 + $0x8] sm:$0xff]
        %v346 = vld [vmem:[%s298 + $0x10] sm:$0xff]
        %v347 = vld [vmem:[%s298 + $0x18] sm:$0xff]
        %v348 = vpack.c.bf16 %v345, %v344
        %v349 = vpack.c.bf16 %v347, %v346
        %v350 = vld [vmem:[#allocation5] sm:$0xf]
        %v351 = vld [vmem:[#allocation5 + $0x4] sm:$0xf]
        %v352 = vld [vmem:[#allocation5 + $0x8] sm:$0xf]
        %v353 = vld [vmem:[#allocation5 + $0xc] sm:$0xf]
        %v354 = vld [vmem:[#allocation5 + $0x10] sm:$0xf]
        %v355 = vld [vmem:[#allocation5 + $0x14] sm:$0xf]
        %v356 = vld [vmem:[#allocation5 + $0x18] sm:$0xf]
        %v357 = vld [vmem:[#allocation5 + $0x1c] sm:$0xf]
        %v358 = vld [vmem:[#allocation5 + $0x20] sm:$0xf]
        %v359 = vld [vmem:[#allocation5 + $0x24] sm:$0xf]
        %v360 = vld [vmem:[#allocation5 + $0x28] sm:$0xf]
        %v361 = vld [vmem:[#allocation5 + $0x2c] sm:$0xf]
        %v362 = vld [vmem:[#allocation5 + $0x30] sm:$0xf]
        %v363 = vld [vmem:[#allocation5 + $0x34] sm:$0xf]
        %v364 = vld [vmem:[#allocation5 + $0x38] sm:$0xf]
        %v365 = vld [vmem:[#allocation5 + $0x3c] sm:$0xf]
        %v366 = vld [vmem:[%s2] sm:$0x1]
        %v368 = vlaneseq
        %v369 = vshrl.u32 %v368, 7
        %v370 = vsub.s32 0, %v369
        %v371 = vrot.slane %v366, %v370
        %v389 = vunpack.c.l.b16 %v350
        %v390 = vunpack.c.l.b16 %v351
        %v391 = vunpack.c.l.b16 %v352
        %v392 = vunpack.c.l.b16 %v353
        %v393 = vunpack.c.l.b16 %v354
        %v394 = vunpack.c.l.b16 %v355
        %v395 = vunpack.c.l.b16 %v356
        %v396 = vunpack.c.l.b16 %v357
        %v397 = vunpack.c.l.b16 %v358
        %v398 = vunpack.c.l.b16 %v359
        %v399 = vunpack.c.l.b16 %v360
        %v400 = vunpack.c.l.b16 %v361
        %v401 = vunpack.c.l.b16 %v362
        %v402 = vunpack.c.l.b16 %v363
        %v403 = vunpack.c.l.b16 %v364
        %v404 = vunpack.c.l.b16 %v365
        %v405 = vpack.c.b16 %v390, %v389
        %v406 = vpack.c.b16 %v392, %v391
        %v407 = vpack.c.b16 %v394, %v393
        %v408 = vpack.c.b16 %v396, %v395
        %v409 = vpack.c.b16 %v398, %v397
        %v410 = vpack.c.b16 %v400, %v399
        %v411 = vpack.c.b16 %v402, %v401
        %v412 = vpack.c.b16 %v404, %v403
        %421 = vmatprep.subr.bf16.mxu0 0
        %422 = vmatpush1.bf16.msra.mxu0 %v405
        %423 = vmatprep.subr.bf16.mxu0 0
        %424 = vmatpush1.bf16.msra.mxu0 %v406
        %425 = vmatprep.subr.bf16.mxu0 0
        %426 = vmatpush1.bf16.msra.mxu0 %v407
        %427 = vmatprep.subr.bf16.mxu0 0
        %428 = vmatpush1.bf16.msra.mxu0 %v408
        %429 = vmatprep.subr.bf16.mxu0 0
        %430 = vmatpush1.bf16.msra.mxu0 %v409
        %431 = vmatprep.subr.bf16.mxu0 0
        %432 = vmatpush1.bf16.msra.mxu0 %v410
        %433 = vmatprep.subr.bf16.mxu0 0
        %434 = vmatpush1.bf16.msra.mxu0 %v411
        %435 = vmatprep.subr.bf16.mxu0 0
        %436 = vmatpush1.bf16.msra.mxu0 %v412
        %437 = vmatprep.subr.bf16.mxu0 0
        %438 = vmatpush1.bf16.msra.mxu0 0
        %439 = vmatprep.subr.bf16.mxu0 0
        %440 = vmatpush1.bf16.msra.mxu0 0
        %441 = vmatprep.subr.bf16.mxu0 0
        %442 = vmatpush1.bf16.msra.mxu0 0
        %443 = vmatprep.subr.bf16.mxu0 0
        %444 = vmatpush1.bf16.msra.mxu0 0
        %445 = vmatprep.subr.bf16.mxu0 0
        %446 = vmatpush1.bf16.msra.mxu0 0
        %447 = vmatprep.subr.bf16.mxu0 0
        %448 = vmatpush1.bf16.msra.mxu0 0
        %449 = vmatprep.subr.bf16.mxu0 0
        %450 = vmatpush1.bf16.msra.mxu0 0
        %451 = vmatprep.subr.bf16.mxu0 0
        %452 = vmatpush1.bf16.msra.mxu0 0
        %453 = vmatprep.mubr.bf16.mxu0 0
        %454 = vmatmul.mubr.bf16.gmra.mrb[0].mxu0 %v348
        %v455 = vpop.f32.mrb[0].mxu0
        %v456 = vadd.f32 %v371, %v455
        %v457 = vpop.f32.mrb[0].mxu0
        %v458 = vpop.f32.mrb[0].mxu0
        %v459 = vadd.f32 %v371, %v458
        %v460 = vpop.f32.mrb[0].mxu0
        %461 = vmatprep.mubr.bf16.mxu0 0
        %462 = vmatmul.mubr.bf16.gmra.mrb[0].mxu0 %v349
        %v463 = vpop.f32.mrb[0].mxu0
        %v464 = vadd.f32 %v371, %v463
        %v465 = vpop.f32.mrb[0].mxu0
        %v466 = vpop.f32.mrb[0].mxu0
        %v467 = vadd.f32 %v371, %v466
        %v468 = vpop.f32.mrb[0].mxu0
        %469 = vdwg.mxu0
        %v470 = vmax.f32 %v456, 0.0
        %v471 = vmax.f32 %v459, 0.0
        %v472 = vmax.f32 %v464, 0.0
        %v473 = vmax.f32 %v467, 0.0
        %v474 = vpack.c.bf16 %v471, %v470
        %v475 = vpack.c.bf16 %v473, %v472
        %v476 = vld [vmem:[#allocation7] sm:$0xf]
        %v477 = vld [vmem:[#allocation7 + $0x4] sm:$0xf]
        %v478 = vld [vmem:[#allocation7 + $0x8] sm:$0xf]
        %v479 = vld [vmem:[#allocation7 + $0xc] sm:$0xf]
        %v480 = vld [vmem:[#allocation7 + $0x10] sm:$0xf]
        %v481 = vld [vmem:[#allocation7 + $0x14] sm:$0xf]
        %v482 = vld [vmem:[#allocation7 + $0x18] sm:$0xf]
        %v483 = vld [vmem:[#allocation7 + $0x1c] sm:$0xf]
        %v484 = vld [vmem:[#allocation7 + $0x20] sm:$0xf]
        %v485 = vld [vmem:[#allocation7 + $0x24] sm:$0xf]
        %v486 = vld [vmem:[#allocation7 + $0x28] sm:$0xf]
        %v487 = vld [vmem:[#allocation7 + $0x2c] sm:$0xf]
        %v488 = vld [vmem:[#allocation7 + $0x30] sm:$0xf]
        %v489 = vld [vmem:[#allocation7 + $0x34] sm:$0xf]
        %v490 = vld [vmem:[#allocation7 + $0x38] sm:$0xf]
        %v491 = vld [vmem:[#allocation7 + $0x3c] sm:$0xf]
        %v492 = vld [vmem:[%s4] sm:$0x1]
        %v494 = vlaneseq
        %v495 = vshrl.u32 %v494, 7
        %v496 = vsub.s32 0, %v495
        %v497 = vrot.slane %v492, %v496
        %v515 = vunpack.c.l.b16 %v476
        %v516 = vunpack.c.l.b16 %v477
        %v517 = vunpack.c.l.b16 %v478
        %v518 = vunpack.c.l.b16 %v479
        %v519 = vunpack.c.l.b16 %v480
        %v520 = vunpack.c.l.b16 %v481
        %v521 = vunpack.c.l.b16 %v482
        %v522 = vunpack.c.l.b16 %v483
        %v523 = vunpack.c.l.b16 %v484
        %v524 = vunpack.c.l.b16 %v485
        %v525 = vunpack.c.l.b16 %v486
        %v526 = vunpack.c.l.b16 %v487
        %v527 = vunpack.c.l.b16 %v488
        %v528 = vunpack.c.l.b16 %v489
        %v529 = vunpack.c.l.b16 %v490
        %v530 = vunpack.c.l.b16 %v491
        %v531 = vpack.c.b16 %v516, %v515
        %v532 = vpack.c.b16 %v518, %v517
        %v533 = vpack.c.b16 %v520, %v519
        %v534 = vpack.c.b16 %v522, %v521
        %v535 = vpack.c.b16 %v524, %v523
        %v536 = vpack.c.b16 %v526, %v525
        %v537 = vpack.c.b16 %v528, %v527
        %v538 = vpack.c.b16 %v530, %v529
        %547 = vmatprep.subr.bf16.mxu0 0
        %548 = vmatpush1.bf16.msra.mxu0 %v531
        %549 = vmatprep.subr.bf16.mxu0 0
        %550 = vmatpush1.bf16.msra.mxu0 %v532
        %551 = vmatprep.subr.bf16.mxu0 0
        %552 = vmatpush1.bf16.msra.mxu0 %v533
        %553 = vmatprep.subr.bf16.mxu0 0
        %554 = vmatpush1.bf16.msra.mxu0 %v534
        %555 = vmatprep.subr.bf16.mxu0 0
        %556 = vmatpush1.bf16.msra.mxu0 %v535
        %557 = vmatprep.subr.bf16.mxu0 0
        %558 = vmatpush1.bf16.msra.mxu0 %v536
        %559 = vmatprep.subr.bf16.mxu0 0
        %560 = vmatpush1.bf16.msra.mxu0 %v537
        %561 = vmatprep.subr.bf16.mxu0 0
        %562 = vmatpush1.bf16.msra.mxu0 %v538
        %563 = vmatprep.subr.bf16.mxu0 0
        %564 = vmatpush1.bf16.msra.mxu0 0
        %565 = vmatprep.subr.bf16.mxu0 0
        %566 = vmatpush1.bf16.msra.mxu0 0
        %567 = vmatprep.subr.bf16.mxu0 0
        %568 = vmatpush1.bf16.msra.mxu0 0
        %569 = vmatprep.subr.bf16.mxu0 0
        %570 = vmatpush1.bf16.msra.mxu0 0
        %571 = vmatprep.subr.bf16.mxu0 0
        %572 = vmatpush1.bf16.msra.mxu0 0
        %573 = vmatprep.subr.bf16.mxu0 0
        %574 = vmatpush1.bf16.msra.mxu0 0
        %575 = vmatprep.subr.bf16.mxu0 0
        %576 = vmatpush1.bf16.msra.mxu0 0
        %577 = vmatprep.subr.bf16.mxu0 0
        %578 = vmatpush1.bf16.msra.mxu0 0
        %579 = vmatprep.mubr.bf16.mxu0 0
        %580 = vmatmul.mubr.bf16.gmra.mrb[0].mxu0 %v474
        %v581 = vpop.f32.mrb[0].mxu0
        %v582 = vadd.f32 %v497, %v581
        %v583 = vpop.f32.mrb[0].mxu0
        %v584 = vpop.f32.mrb[0].mxu0
        %v585 = vadd.f32 %v497, %v584
        %v586 = vpop.f32.mrb[0].mxu0
        %587 = vmatprep.mubr.bf16.mxu0 0
        %588 = vmatmul.mubr.bf16.gmra.mrb[0].mxu0 %v475
        %v589 = vpop.f32.mrb[0].mxu0
        %v590 = vadd.f32 %v497, %v589
        %v591 = vpop.f32.mrb[0].mxu0
        %v592 = vpop.f32.mrb[0].mxu0
        %v593 = vadd.f32 %v497, %v592
        %v594 = vpop.f32.mrb[0].mxu0
        %595 = vdwg.mxu0
        %v596 = vmax.f32 %v582, 0.0
        %v597 = vmax.f32 %v585, 0.0
        %v598 = vmax.f32 %v590, 0.0
        %v599 = vmax.f32 %v593, 0.0
        %v600 = vpack.c.bf16 %v597, %v596
        %v601 = vpack.c.bf16 %v599, %v598
        %s602 = scalar_lea.vmem [#allocation7], 64
        %v603 = vld [vmem:[%s602] sm:$0xf]
        %v604 = vld [vmem:[%s602 + $0x4] sm:$0xf]
        %v605 = vld [vmem:[%s602 + $0x8] sm:$0xf]
        %v606 = vld [vmem:[%s602 + $0xc] sm:$0xf]
        %v607 = vld [vmem:[%s602 + $0x10] sm:$0xf]
        %v608 = vld [vmem:[%s602 + $0x14] sm:$0xf]
        %v609 = vld [vmem:[%s602 + $0x18] sm:$0xf]
        %v610 = vld [vmem:[%s602 + $0x1c] sm:$0xf]
        %v611 = vld [vmem:[%s602 + $0x20] sm:$0xf]
        %v612 = vld [vmem:[%s602 + $0x24] sm:$0xf]
        %v613 = vld [vmem:[%s602 + $0x28] sm:$0xf]
        %v614 = vld [vmem:[%s602 + $0x2c] sm:$0xf]
        %v615 = vld [vmem:[%s602 + $0x30] sm:$0xf]
        %v616 = vld [vmem:[%s602 + $0x34] sm:$0xf]
        %v617 = vld [vmem:[%s602 + $0x38] sm:$0xf]
        %v618 = vld [vmem:[%s602 + $0x3c] sm:$0xf]
        %s619 = scalar_lea.vmem %s4, 1
        %v620 = vld [vmem:[%s619] sm:$0x1]
        %v622 = vlaneseq
        %v623 = vshrl.u32 %v622, 7
        %v624 = vsub.s32 0, %v623
        %v625 = vrot.slane %v620, %v624
        %v643 = vunpack.c.l.b16 %v603
        %v644 = vunpack.c.l.b16 %v604
        %v645 = vunpack.c.l.b16 %v605
        %v646 = vunpack.c.l.b16 %v606
        %v647 = vunpack.c.l.b16 %v607
        %v648 = vunpack.c.l.b16 %v608
        %v649 = vunpack.c.l.b16 %v609
        %v650 = vunpack.c.l.b16 %v610
        %v651 = vunpack.c.l.b16 %v611
        %v652 = vunpack.c.l.b16 %v612
        %v653 = vunpack.c.l.b16 %v613
        %v654 = vunpack.c.l.b16 %v614
        %v655 = vunpack.c.l.b16 %v615
        %v656 = vunpack.c.l.b16 %v616
        %v657 = vunpack.c.l.b16 %v617
        %v658 = vunpack.c.l.b16 %v618
        %v659 = vpack.c.b16 %v644, %v643
        %v660 = vpack.c.b16 %v646, %v645
        %v661 = vpack.c.b16 %v648, %v647
        %v662 = vpack.c.b16 %v650, %v649
        %v663 = vpack.c.b16 %v652, %v651
        %v664 = vpack.c.b16 %v654, %v653
        %v665 = vpack.c.b16 %v656, %v655
        %v666 = vpack.c.b16 %v658, %v657
        %675 = vmatprep.subr.bf16.mxu0 0
        %676 = vmatpush1.bf16.msra.mxu0 %v659
        %677 = vmatprep.subr.bf16.mxu0 0
        %678 = vmatpush1.bf16.msra.mxu0 %v660
        %679 = vmatprep.subr.bf16.mxu0 0
        %680 = vmatpush1.bf16.msra.mxu0 %v661
        %681 = vmatprep.subr.bf16.mxu0 0
        %682 = vmatpush1.bf16.msra.mxu0 %v662
        %683 = vmatprep.subr.bf16.mxu0 0
        %684 = vmatpush1.bf16.msra.mxu0 %v663
        %685 = vmatprep.subr.bf16.mxu0 0
        %686 = vmatpush1.bf16.msra.mxu0 %v664
        %687 = vmatprep.subr.bf16.mxu0 0
        %688 = vmatpush1.bf16.msra.mxu0 %v665
        %689 = vmatprep.subr.bf16.mxu0 0
        %690 = vmatpush1.bf16.msra.mxu0 %v666
        %691 = vmatprep.subr.bf16.mxu0 0
        %692 = vmatpush1.bf16.msra.mxu0 0
        %693 = vmatprep.subr.bf16.mxu0 0
        %694 = vmatpush1.bf16.msra.mxu0 0
        %695 = vmatprep.subr.bf16.mxu0 0
        %696 = vmatpush1.bf16.msra.mxu0 0
        %697 = vmatprep.subr.bf16.mxu0 0
        %698 = vmatpush1.bf16.msra.mxu0 0
        %699 = vmatprep.subr.bf16.mxu0 0
        %700 = vmatpush1.bf16.msra.mxu0 0
        %701 = vmatprep.subr.bf16.mxu0 0
        %702 = vmatpush1.bf16.msra.mxu0 0
        %703 = vmatprep.subr.bf16.mxu0 0
        %704 = vmatpush1.bf16.msra.mxu0 0
        %705 = vmatprep.subr.bf16.mxu0 0
        %706 = vmatpush1.bf16.msra.mxu0 0
        %707 = vmatprep.mubr.bf16.mxu0 0
        %708 = vmatmul.mubr.bf16.gmra.mrb[0].mxu0 %v600
        %v709 = vpop.f32.mrb[0].mxu0
        %v710 = vadd.f32 %v625, %v709
        %v711 = vpop.f32.mrb[0].mxu0
        %v712 = vpop.f32.mrb[0].mxu0
        %v713 = vadd.f32 %v625, %v712
        %v714 = vpop.f32.mrb[0].mxu0
        %715 = vmatprep.mubr.bf16.mxu0 0
        %716 = vmatmul.mubr.bf16.gmra.mrb[0].mxu0 %v601
        %v717 = vpop.f32.mrb[0].mxu0
        %v718 = vadd.f32 %v625, %v717
        %v719 = vpop.f32.mrb[0].mxu0
        %v720 = vpop.f32.mrb[0].mxu0
        %v721 = vadd.f32 %v625, %v720
        %v722 = vpop.f32.mrb[0].mxu0
        %723 = vdwg.mxu0
        %v724 = vmax.f32 %v710, 0.0
        %v725 = vmax.f32 %v713, 0.0
        %v726 = vmax.f32 %v718, 0.0
        %v727 = vmax.f32 %v721, 0.0
        %v728 = vpack.c.bf16 %v725, %v724
        %v729 = vpack.c.bf16 %v727, %v726
        %v730 = vld [vmem:[#allocation8] sm:$0xf]
        %v731 = vld [vmem:[#allocation8 + $0x4] sm:$0xf]
        %v732 = vld [vmem:[#allocation8 + $0x8] sm:$0xf]
        %v733 = vld [vmem:[#allocation8 + $0xc] sm:$0xf]
        %v734 = vld [vmem:[#allocation8 + $0x10] sm:$0xf]
        %v735 = vld [vmem:[#allocation8 + $0x14] sm:$0xf]
        %v736 = vld [vmem:[#allocation8 + $0x18] sm:$0xf]
        %v737 = vld [vmem:[#allocation8 + $0x1c] sm:$0xf]
        %v738 = vld [vmem:[#allocation8 + $0x20] sm:$0xf]
        %v739 = vld [vmem:[#allocation8 + $0x24] sm:$0xf]
        %v740 = vld [vmem:[#allocation8 + $0x28] sm:$0xf]
        %v741 = vld [vmem:[#allocation8 + $0x2c] sm:$0xf]
        %v742 = vld [vmem:[#allocation8 + $0x30] sm:$0xf]
        %v743 = vld [vmem:[#allocation8 + $0x34] sm:$0xf]
        %v744 = vld [vmem:[#allocation8 + $0x38] sm:$0xf]
        %v745 = vld [vmem:[#allocation8 + $0x3c] sm:$0xf]
        %v746 = vld [vmem:[%s6] sm:$0x1]
        %v748 = vlaneseq
        %v749 = vshrl.u32 %v748, 7
        %v750 = vsub.s32 0, %v749
        %v751 = vrot.slane %v746, %v750
        %v769 = vunpack.c.l.b16 %v730
        %v770 = vunpack.c.l.b16 %v731
        %v771 = vunpack.c.l.b16 %v732
        %v772 = vunpack.c.l.b16 %v733
        %v773 = vunpack.c.l.b16 %v734
        %v774 = vunpack.c.l.b16 %v735
        %v775 = vunpack.c.l.b16 %v736
        %v776 = vunpack.c.l.b16 %v737
        %v777 = vunpack.c.l.b16 %v738
        %v778 = vunpack.c.l.b16 %v739
        %v779 = vunpack.c.l.b16 %v740
        %v780 = vunpack.c.l.b16 %v741
        %v781 = vunpack.c.l.b16 %v742
        %v782 = vunpack.c.l.b16 %v743
        %v783 = vunpack.c.l.b16 %v744
        %v784 = vunpack.c.l.b16 %v745
        %v785 = vpack.c.b16 %v770, %v769
        %v786 = vpack.c.b16 %v772, %v771
        %v787 = vpack.c.b16 %v774, %v773
        %v788 = vpack.c.b16 %v776, %v775
        %v789 = vpack.c.b16 %v778, %v777
        %v790 = vpack.c.b16 %v780, %v779
        %v791 = vpack.c.b16 %v782, %v781
        %v792 = vpack.c.b16 %v784, %v783
        %801 = vmatprep.subr.bf16.mxu0 0
        %802 = vmatpush1.bf16.msra.mxu0 %v785
        %803 = vmatprep.subr.bf16.mxu0 0
        %804 = vmatpush1.bf16.msra.mxu0 %v786
        %805 = vmatprep.subr.bf16.mxu0 0
        %806 = vmatpush1.bf16.msra.mxu0 %v787
        %807 = vmatprep.subr.bf16.mxu0 0
        %808 = vmatpush1.bf16.msra.mxu0 %v788
        %809 = vmatprep.subr.bf16.mxu0 0
        %810 = vmatpush1.bf16.msra.mxu0 %v789
        %811 = vmatprep.subr.bf16.mxu0 0
        %812 = vmatpush1.bf16.msra.mxu0 %v790
        %813 = vmatprep.subr.bf16.mxu0 0
        %814 = vmatpush1.bf16.msra.mxu0 %v791
        %815 = vmatprep.subr.bf16.mxu0 0
        %816 = vmatpush1.bf16.msra.mxu0 %v792
        %817 = vmatprep.subr.bf16.mxu0 0
        %818 = vmatpush1.bf16.msra.mxu0 0
        %819 = vmatprep.subr.bf16.mxu0 0
        %820 = vmatpush1.bf16.msra.mxu0 0
        %821 = vmatprep.subr.bf16.mxu0 0
        %822 = vmatpush1.bf16.msra.mxu0 0
        %823 = vmatprep.subr.bf16.mxu0 0
        %824 = vmatpush1.bf16.msra.mxu0 0
        %825 = vmatprep.subr.bf16.mxu0 0
        %826 = vmatpush1.bf16.msra.mxu0 0
        %827 = vmatprep.subr.bf16.mxu0 0
        %828 = vmatpush1.bf16.msra.mxu0 0
        %829 = vmatprep.subr.bf16.mxu0 0
        %830 = vmatpush1.bf16.msra.mxu0 0
        %831 = vmatprep.subr.bf16.mxu0 0
        %832 = vmatpush1.bf16.msra.mxu0 0
        %833 = vmatprep.mubr.bf16.mxu0 0
        %834 = vmatmul.mubr.bf16.gmra.mrb[0].mxu0 %v728
        %v835 = vpop.f32.mrb[0].mxu0
        %v836 = vadd.f32 %v751, %v835
        %v837 = vpop.f32.mrb[0].mxu0
        %v838 = vpop.f32.mrb[0].mxu0
        %v839 = vadd.f32 %v751, %v838
        %v840 = vpop.f32.mrb[0].mxu0
        %841 = vmatprep.mubr.bf16.mxu0 0
        %842 = vmatmul.mubr.bf16.gmra.mrb[0].mxu0 %v729
        %v843 = vpop.f32.mrb[0].mxu0
        %v844 = vadd.f32 %v751, %v843
        %v845 = vpop.f32.mrb[0].mxu0
        %v846 = vpop.f32.mrb[0].mxu0
        %v847 = vadd.f32 %v751, %v846
        %v848 = vpop.f32.mrb[0].mxu0
        %849 = vdwg.mxu0
        %v850 = vmax.f32 %v836, 0.0
        %v851 = vmax.f32 %v839, 0.0
        %v852 = vmax.f32 %v844, 0.0
        %v853 = vmax.f32 %v847, 0.0
        %v854 = vadd.f32 %v850, %v344
        %v855 = vadd.f32 %v851, %v345
        %v856 = vadd.f32 %v852, %v346
        %v857 = vadd.f32 %v853, %v347
        %v858 = vsub.f32 0.0, %v854
        %v859 = vsub.f32 0.0, %v855
        %v860 = vsub.f32 0.0, %v856
        %v861 = vsub.f32 0.0, %v857
        %v862 = vmin.f32 %v858, 80.0
        %v863 = vmin.f32 %v859, 80.0
        %v864 = vmin.f32 %v860, 80.0
        %v865 = vmin.f32 %v861, 80.0
        %v866 = vmul.f32 %v862, 1.442695
        %v867 = vpow.pop %v866
        %v868 = vmul.f32 %v863, 1.442695
        %v869 = vpow.pop %v868
        %v870 = vmul.f32 %v864, 1.442695
        %v871 = vpow.pop %v870
        %v872 = vmul.f32 %v865, 1.442695
        %v873 = vpow.pop %v872
        %v874 = vadd.f32 %v867, 1.0
        %v875 = vadd.f32 %v869, 1.0
        %v876 = vadd.f32 %v871, 1.0
        %v877 = vadd.f32 %v873, 1.0
        %v878 = vrcp.pop %v874
        %v879 = vrcp.pop %v875
        %v880 = vrcp.pop %v876
        %v881 = vrcp.pop %v877
        %882 = vst [vmem:[%s340] sm:$0xff] %v878
        %883 = vst [vmem:[%s340 + $0x8] sm:$0xff] %v879
        %884 = vst [vmem:[%s340 + $0x10] sm:$0xff] %v880
        %885 = vst [vmem:[%s340 + $0x18] sm:$0xff] %v881
        %s886 = sand.u32 %s186, 1
        %s887 = scalar_lea.sflag [#allocation4], %s886
        %s888 = sand.u32 %s186, 1
        %s889 = smul.addr %s888, 32
        %s890 = scalar_lea.vmem [#allocation10], %s889
        // Predicated region
        $region65: #{tpu_custom_call.1} parent=47 // pred_check
          %p891 = pneg %p196
        $region66: #{tpu_custom_call.1} parent=47 // pred_check_branch
          %893 = sbr.rel (%p891) target = $region68
        $region67: #{tpu_custom_call.1} parent=47 // pred_region
          %s894 = smul.u32 4, %s26
          %s896 = ssub.s32 512, 512
          %897 = vsyncadd %s887, %s896
          %s898 = smul.addr %s894, 128
          %s899 = scalar_lea.hbm %s7, %s898
          %s900 = sshll.u32 %s890, 4
          %s901 = int_to_ptr.vmem [resolvable:$true] %s900
          %906 = dma.vmem_to_hbm [thread:$0]  %s901, 512, %s899, %s887, 128, 128, 8
        $region68: #{tpu_custom_call.1} parent=47 // pred_fallthru
          _
      $region48: #{tpu_custom_call.1} parent=5 // pred_fallthru
        _
      %p907 = scmp.le.s32.totalorder 2, %s21
      // Predicated region
      $region69: #{tpu_custom_call.1} parent=5 // pred_check
        %p908 = pneg %p907
      $region70: #{tpu_custom_call.1} parent=5 // pred_check_branch
        %910 = sbr.rel (%p908) target = $region72
      $region71: #{tpu_custom_call.1} parent=5 // pred_region
        %s911 = ssub.s32 %s21, 2
        // Predicated region
        $region73: #{tpu_custom_call.1} parent=71 // pred_check
          %p912 = pneg %p202
        $region74: #{tpu_custom_call.1} parent=71 // pred_check_branch
          %914 = sbr.rel (%p912) target = $region76
        $region75: #{tpu_custom_call.1} parent=71 // pred_region
          %s915 = sand.u32 %s187, 1
          %s916 = scalar_lea.sflag [#allocation4], %s915
          %s917 = sand.u32 %s187, 1
          %s918 = smul.addr %s917, 32
          %s919 = scalar_lea.vmem [#allocation10], %s918
          %920 = dma.done %s916, 512
        $region76: #{tpu_custom_call.1} parent=71 // pred_fallthru
          _
      $region72: #{tpu_custom_call.1} parent=5 // pred_fallthru
        _
    $region6: #{tpu_custom_call.1} parent=1 // loop_footer
      %s25 = sadd.s32 1, %s21
    $region7: #{tpu_custom_call.1} parent=1 // loop_footer_branch
      %20 = sbr.rel target = $region3
    $region8: #{tpu_custom_call.1} parent=1 // loop_exit
      _
    %921 = vsyncpa [#allocation3], 1
    %s922 = scalar_lea.sflag [#allocation3], 1
    %923 = vsyncpa %s922, 1
    %924 = vsyncpa [#allocation6], 1
    %925 = vsyncpa [#allocation9], 1
    %926 = vsyncpa [#allocation4], 1
    %s927 = scalar_lea.sflag [#allocation4], 1
    %928 = vsyncpa %s927, 1

</llo_original>
